<compile_context>
chip_gen: v6e
topology: v6e:2x2x1
jax: 0.10.0
libtpu: 0.0.40
codegen_flags: <defaults>
</compile_context>

<pallas_src>
import functools

import jax
import jax.numpy as jnp
from jax.experimental import pallas as pl
from jax.experimental.pallas import tpu as pltpu

INPUT_SIZE = 8     # LunarLander-v2 observation_space.shape[0]
OUTPUT_SIZE = 4    # LunarLander-v2 action_space.n
H1 = 512
H2 = 256
PAD_OUT = 8        # output features padded 4 -> 8 (one sublane)
LANE = 128         # batch (lane) tile granularity


def _round_up(n, m):
    return ((n + m - 1) // m) * m


def qnetwork_kernel(x_ref, w1_ref, b1_ref, w2_ref, b2_ref, w3_ref, b3_ref,
                    out_ref):
    # x_ref: (8, TB) f32 slab of x^T (batch on lanes); cast to bf16 for MXU.
    xT = x_ref[...].astype(jnp.bfloat16)
    # fc1 + ReLU: (512, 8) @ (8, TB) -> (512, TB), f32 accumulation.
    h1 = jnp.dot(w1_ref[...], xT, preferred_element_type=jnp.float32)
    h1 = jnp.maximum(h1 + b1_ref[...], 0.0)
    # fc2 + ReLU: (256, 512) @ (512, TB) -> (256, TB).
    h2 = jnp.dot(w2_ref[...], h1.astype(jnp.bfloat16),
                 preferred_element_type=jnp.float32)
    h2 = jnp.maximum(h2 + b2_ref[...], 0.0)
    # fc3 (no activation): (8, 256) @ (256, TB) -> (8, TB); rows 4..7 stay
    # exactly zero because the corresponding w3/b3 rows are zero.
    out = jnp.dot(w3_ref[...], h2.astype(jnp.bfloat16),
                  preferred_element_type=jnp.float32)
    out_ref[...] = (out + b3_ref[...]).astype(out_ref.dtype)


@functools.partial(jax.jit, static_argnames=("batch_tile",))
def qnetwork_forward(x, params, *, batch_tile=2048):
    """x: (batch, 8) f32 -> (batch, 4) f32 Q-values."""
    w1, b1, w2, b2, w3, b3 = params
    batch = x.shape[0]

    # Batch (lane) tile: multiple of 128, capped at batch_tile, and chosen so
    # the grid has >= 2 steps whenever the padded batch allows it (keeps both
    # v7x TensorCores busy; no-op on single-TC v5e/v6e).
    b_min = _round_up(batch, LANE)
    if b_min >= 2 * LANE:
        tb = _round_up((batch + 1) // 2, LANE)
    else:
        tb = b_min
    tb = max(LANE, min(batch_tile, tb))
    b_pad = _round_up(batch, tb)

    # Feature-major input slab: (8, b_pad) f32, zero-padded batch columns.
    # Transpose+cast+pad fuse into one small XLA op (only 8 rows of data).
    x_t = jnp.pad(x.T.astype(jnp.float32), ((0, 0), (0, b_pad - batch)))

    grid = (b_pad // tb,)

    out_t = pl.pallas_call(
        qnetwork_kernel,
        out_shape=jax.ShapeDtypeStruct((PAD_OUT, b_pad), jnp.float32),
        grid=grid,
        in_specs=[
            # Activations: streamed / double-buffered along the batch grid.
            pl.BlockSpec((INPUT_SIZE, tb), lambda i: (0, i)),
            # Weights & biases: constant index_map -> fetched once, stay
            # VMEM-resident across all grid steps.
            pl.BlockSpec((H1, INPUT_SIZE), lambda i: (0, 0)),
            pl.BlockSpec((H1, 1), lambda i: (0, 0)),
            pl.BlockSpec((H2, H1), lambda i: (0, 0)),
            pl.BlockSpec((H2, 1), lambda i: (0, 0)),
            pl.BlockSpec((PAD_OUT, H2), lambda i: (0, 0)),
            pl.BlockSpec((PAD_OUT, 1), lambda i: (0, 0)),
        ],
        out_specs=pl.BlockSpec((PAD_OUT, tb), lambda i: (0, i)),
        compiler_params=pltpu.CompilerParams(
            dimension_semantics=("parallel",),  # v7x: shard batch across 2 TCs
        ),
    )(x_t, w1, b1, w2, b2, w3, b3)

    # Strip the 4 zero pad rows and the batch padding; back to (batch, 4).
    return out_t[:OUTPUT_SIZE, :batch].T


def init_params(key):
    """PyTorch nn.Linear-style init (U[-1/sqrt(fan_in), 1/sqrt(fan_in)]).

    Weights are kept in PyTorch [out, in] orientation, cast to bfloat16
    (halved DMA / VMEM; f32 accumulation in-kernel).  Biases are f32 column
    vectors (out, 1) so they broadcast over the lane/batch axis.  fc3 weight
    and bias are zero-padded 4 -> 8 output rows.
    """
    keys = jax.random.split(key, 6)

    def linear(kw, kb, fan_in, fan_out, pad_out=None):
        bound = 1.0 / jnp.sqrt(jnp.float32(fan_in))
        w = jax.random.uniform(kw, (fan_out, fan_in), jnp.float32, -bound, bound)
        b = jax.random.uniform(kb, (fan_out, 1), jnp.float32, -bound, bound)
        if pad_out is not None:
            w = jnp.pad(w, ((0, pad_out - fan_out), (0, 0)))
            b = jnp.pad(b, ((0, pad_out - fan_out), (0, 0)))
        return w.astype(jnp.bfloat16), b

    w1, b1 = linear(keys[0], keys[1], INPUT_SIZE, H1)
    w2, b2 = linear(keys[2], keys[3], H1, H2)
    w3, b3 = linear(keys[4], keys[5], H2, OUTPUT_SIZE, pad_out=PAD_OUT)
    return (w1, b1, w2, b2, w3, b3)


def reference_forward(x, params):
    """Pure-JAX f32 reference using the (bf16-cast) parameter values.

    Note: weights (and inter-layer activations in the kernel) are bf16, so
    this validates the quantized model, not an f32 PyTorch module bit-for-bit.
    """
    w1, b1, w2, b2, w3, b3 = params
    w1f = w1.astype(jnp.float32)
    w2f = w2.astype(jnp.float32)
    w3f = w3.astype(jnp.float32)[:OUTPUT_SIZE, :]
    b3f = b3[:OUTPUT_SIZE, 0]
    h1 = jnp.maximum(x @ w1f.T + b1[:, 0], 0.0)
    h2 = jnp.maximum(h1 @ w2f.T + b2[:, 0], 0.0)
    return h2 @ w3f.T + b3f


if __name__ == "__main__":
    key = jax.random.PRNGKey(0)
    pkey, xkey = jax.random.split(key)
    params = init_params(pkey)

    # batch=2: tiny demo shape (single grid step).
    # batch=1024: exercises the multi-step batch grid / resident-weight path.
    for batch in (2, 1024):
        x = jax.random.normal(jax.random.fold_in(xkey, batch),
                              (batch, INPUT_SIZE), jnp.float32)
        out = jax.block_until_ready(qnetwork_forward(x, params))
        ref = reference_forward(x, params)
        assert out.shape == (batch, OUTPUT_SIZE), out.shape
        max_err = jnp.max(jnp.abs(out - ref))
        # Tolerance covers bf16 matmul inputs (f32 accumulation) vs f32 ref.
        assert jnp.allclose(out, ref, atol=3e-2, rtol=3e-2), (
            f"batch={batch}: max abs err {max_err}")

    print("KERNEL_OK")
</pallas_src>

<mosaic_0001>
module attributes {stable_mosaic.version = 11 : i64} {
  func.func @qnetwork_kernel(%arg0: i32, %arg1: memref<8x128xf32, #tpu.memory_space<vmem>>, %arg2: memref<512x8xbf16, #tpu.memory_space<vmem>>, %arg3: memref<512x1xf32, #tpu.memory_space<vmem>>, %arg4: memref<256x512xbf16, #tpu.memory_space<vmem>>, %arg5: memref<256x1xf32, #tpu.memory_space<vmem>>, %arg6: memref<8x256xbf16, #tpu.memory_space<vmem>>, %arg7: memref<8x1xf32, #tpu.memory_space<vmem>>, %arg8: memref<8x128xf32, #tpu.memory_space<vmem>>) attributes {dimension_semantics = [#tpu.dimension_semantics<parallel>], iteration_bounds = array<i64: 1>, scalar_prefetch = 0 : i64, scratch_operands = 0 : i64, tpu.core_type = #tpu.core_type<tc>, window_params = [{transform_indices = @transform_0, window_bounds = array<i64: 8, 128>}, {pipeline_mode = #tpu.pipeline_mode<synchronous>, transform_indices = @transform_1, window_bounds = array<i64: 512, 8>}, {pipeline_mode = #tpu.pipeline_mode<synchronous>, transform_indices = @transform_2, window_bounds = array<i64: 512, 1>}, {pipeline_mode = #tpu.pipeline_mode<synchronous>, transform_indices = @transform_3, window_bounds = array<i64: 256, 512>}, {pipeline_mode = #tpu.pipeline_mode<synchronous>, transform_indices = @transform_4, window_bounds = array<i64: 256, 1>}, {pipeline_mode = #tpu.pipeline_mode<synchronous>, transform_indices = @transform_5, window_bounds = array<i64: 8, 256>}, {pipeline_mode = #tpu.pipeline_mode<synchronous>, transform_indices = @transform_6, window_bounds = array<i64: 8, 1>}, {transform_indices = @transform_7, window_bounds = array<i64: 8, 128>}]} {
    %c0 = arith.constant 0 : index
    %c0_0 = arith.constant 0 : index
    %0 = vector.load %arg1[%c0, %c0_0] : memref<8x128xf32, #tpu.memory_space<vmem>>, vector<8x128xf32>
    %1 = arith.truncf %0 : vector<8x128xf32> to vector<8x128xbf16>
    %c0_1 = arith.constant 0 : index
    %c0_2 = arith.constant 0 : index
    %2 = vector.load %arg2[%c0_1, %c0_2] : memref<512x8xbf16, #tpu.memory_space<vmem>>, vector<512x8xbf16>
    %cst = arith.constant dense<0.000000e+00> : vector<512x128xf32>
    %3 = tpu.matmul %2, %1, %cst {dimension_numbers = #tpu.dot_dimension_numbers<[1], [0], [0], [1], [0, 0, 1, 1], [], []>} : vector<512x8xbf16>, vector<8x128xbf16>, vector<512x128xf32> -> vector<512x128xf32>
    %c0_3 = arith.constant 0 : index
    %c0_4 = arith.constant 0 : index
    %4 = vector.load %arg3[%c0_3, %c0_4] : memref<512x1xf32, #tpu.memory_space<vmem>>, vector<512x1xf32>
    %5 = vector.broadcast %4 : vector<512x1xf32> to vector<512x128xf32>
    %6 = arith.addf %3, %5 : vector<512x128xf32>
    %cst_5 = arith.constant 0.000000e+00 : f32
    %7 = vector.broadcast %cst_5 : f32 to vector<512x128xf32>
    %8 = arith.maximumf %6, %7 : vector<512x128xf32>
    %c0_6 = arith.constant 0 : index
    %c0_7 = arith.constant 0 : index
    %9 = vector.load %arg4[%c0_6, %c0_7] : memref<256x512xbf16, #tpu.memory_space<vmem>>, vector<256x512xbf16>
    %10 = arith.truncf %8 : vector<512x128xf32> to vector<512x128xbf16>
    %cst_8 = arith.constant dense<0.000000e+00> : vector<256x128xf32>
    %11 = tpu.matmul %9, %10, %cst_8 {dimension_numbers = #tpu.dot_dimension_numbers<[1], [0], [0], [1], [0, 0, 1, 1], [], []>} : vector<256x512xbf16>, vector<512x128xbf16>, vector<256x128xf32> -> vector<256x128xf32>
    %c0_9 = arith.constant 0 : index
    %c0_10 = arith.constant 0 : index
    %12 = vector.load %arg5[%c0_9, %c0_10] : memref<256x1xf32, #tpu.memory_space<vmem>>, vector<256x1xf32>
    %13 = vector.broadcast %12 : vector<256x1xf32> to vector<256x128xf32>
    %14 = arith.addf %11, %13 : vector<256x128xf32>
    %cst_11 = arith.constant 0.000000e+00 : f32
    %15 = vector.broadcast %cst_11 : f32 to vector<256x128xf32>
    %16 = arith.maximumf %14, %15 : vector<256x128xf32>
    %c0_12 = arith.constant 0 : index
    %c0_13 = arith.constant 0 : index
    %17 = vector.load %arg6[%c0_12, %c0_13] : memref<8x256xbf16, #tpu.memory_space<vmem>>, vector<8x256xbf16>
    %18 = arith.truncf %16 : vector<256x128xf32> to vector<256x128xbf16>
    %cst_14 = arith.constant dense<0.000000e+00> : vector<8x128xf32>
    %19 = tpu.matmul %17, %18, %cst_14 {dimension_numbers = #tpu.dot_dimension_numbers<[1], [0], [0], [1], [0, 0, 1, 1], [], []>} : vector<8x256xbf16>, vector<256x128xbf16>, vector<8x128xf32> -> vector<8x128xf32>
    %c0_15 = arith.constant 0 : index
    %c0_16 = arith.constant 0 : index
    %20 = vector.load %arg7[%c0_15, %c0_16] : memref<8x1xf32, #tpu.memory_space<vmem>>, vector<8x1xf32>
    %21 = vector.broadcast %20 : vector<8x1xf32> to vector<8x128xf32>
    %22 = arith.addf %19, %21 : vector<8x128xf32>
    %c0_17 = arith.constant 0 : index
    %c0_18 = arith.constant 0 : index
    %23 = vector.load %arg8[%c0_17, %c0_18] : memref<8x128xf32, #tpu.memory_space<vmem>>, vector<8x128xf32>
    tpu.vector_store %arg8[%c0_17, %c0_18], %22 {strides = array<i32>} : memref<8x128xf32, #tpu.memory_space<vmem>>, vector<8x128xf32>,
    return
  }
  func.func @transform_0(%arg0: i32) -> (i32, i32) {
    %c0_i32 = arith.constant 0 : i32
    %c0_i32_0 = arith.constant 0 : i32
    return %c0_i32, %arg0 : i32, i32
  }
  func.func @transform_1(%arg0: i32) -> (i32, i32) {
    %c0_i32 = arith.constant 0 : i32
    %c0_i32_0 = arith.constant 0 : i32
    %c0_i32_1 = arith.constant 0 : i32
    return %c0_i32, %c0_i32_0 : i32, i32
  }
  func.func @transform_2(%arg0: i32) -> (i32, i32) {
    %c0_i32 = arith.constant 0 : i32
    %c0_i32_0 = arith.constant 0 : i32
    %c0_i32_1 = arith.constant 0 : i32
    return %c0_i32, %c0_i32_0 : i32, i32
  }
  func.func @transform_3(%arg0: i32) -> (i32, i32) {
    %c0_i32 = arith.constant 0 : i32
    %c0_i32_0 = arith.constant 0 : i32
    %c0_i32_1 = arith.constant 0 : i32
    return %c0_i32, %c0_i32_0 : i32, i32
  }
  func.func @transform_4(%arg0: i32) -> (i32, i32) {
    %c0_i32 = arith.constant 0 : i32
    %c0_i32_0 = arith.constant 0 : i32
    %c0_i32_1 = arith.constant 0 : i32
    return %c0_i32, %c0_i32_0 : i32, i32
  }
  func.func @transform_5(%arg0: i32) -> (i32, i32) {
    %c0_i32 = arith.constant 0 : i32
    %c0_i32_0 = arith.constant 0 : i32
    %c0_i32_1 = arith.constant 0 : i32
    return %c0_i32, %c0_i32_0 : i32, i32
  }
  func.func @transform_6(%arg0: i32) -> (i32, i32) {
    %c0_i32 = arith.constant 0 : i32
    %c0_i32_0 = arith.constant 0 : i32
    %c0_i32_1 = arith.constant 0 : i32
    return %c0_i32, %c0_i32_0 : i32, i32
  }
  func.func @transform_7(%arg0: i32) -> (i32, i32) {
    %c0_i32 = arith.constant 0 : i32
    %c0_i32_0 = arith.constant 0 : i32
    return %c0_i32, %arg0 : i32, i32
  }
}

</mosaic_0001>

<llo_original>
// kernel: qnetwork_forward.1
$region0: #{qnetwork_forward.1}
  #allocation0 [shape = 'u32[]', space=smem, size = 0x4, offset = 0x4, fixed_abs, tag = 'smem constant byte address 0x4 - core index']
  #allocation1 [shape = 'u32[144,128]{1,0:T(1,128)}', space=vmem, size = 0x12000, scoped, tag = 'internal scratch']
  %s0 = inlined_call_operand.vmem [shape: f32[8,128], index: 0, kind: input, shape index: {}]
  %s1 = inlined_call_operand.vmem [shape: bf16[512,8], index: 1, kind: input, shape index: {}]
  %s2 = inlined_call_operand.vmem [shape: f32[512,1], index: 2, kind: input, shape index: {}]
  %s3 = inlined_call_operand.vmem [shape: bf16[256,512], index: 3, kind: input, shape index: {}]
  %s4 = inlined_call_operand.vmem [shape: f32[256,1], index: 4, kind: input, shape index: {}]
  %s5 = inlined_call_operand.vmem [shape: bf16[8,256], index: 5, kind: input, shape index: {}]
  %s6 = inlined_call_operand.vmem [shape: f32[8,1], index: 6, kind: input, shape index: {}]
  %s7 = inlined_call_operand.vmem [shape: f32[8,128], index: 7, kind: output, shape index: {}]
  %s8 = sld [smem:[#allocation0]]
  $region38: #{qnetwork_forward.1} parent=0
    _
  %s10 = ssub.s32 1, %s8
  %s11 = scalar_select 0, %s10, %s8
  // Predicated region
  $region2: #{qnetwork_forward.1} parent=0 // pred_check
    _
  $region3: #{qnetwork_forward.1} parent=0 // pred_check_branch
    %13 = sbr.rel (0) target = $region5
  $region4: #{qnetwork_forward.1} parent=0 // pred_region
    _
  $region5: #{qnetwork_forward.1} parent=0 // pred_fallthru
    _
  // Predicated region
  $region6: #{qnetwork_forward.1} parent=0 // pred_check
    _
  $region7: #{qnetwork_forward.1} parent=0 // pred_check_branch
    %15 = sbr.rel (0) target = $region9
  $region8: #{qnetwork_forward.1} parent=0 // pred_region
    _
  $region9: #{qnetwork_forward.1} parent=0 // pred_fallthru
    _
  // Predicated region
  $region10: #{qnetwork_forward.1} parent=0 // pred_check
    _
  $region11: #{qnetwork_forward.1} parent=0 // pred_check_branch
    %17 = sbr.rel (0) target = $region13
  $region12: #{qnetwork_forward.1} parent=0 // pred_region
    _
  $region13: #{qnetwork_forward.1} parent=0 // pred_fallthru
    _
  // Predicated region
  $region14: #{qnetwork_forward.1} parent=0 // pred_check
    _
  $region15: #{qnetwork_forward.1} parent=0 // pred_check_branch
    %19 = sbr.rel (0) target = $region17
  $region16: #{qnetwork_forward.1} parent=0 // pred_region
    _
  $region17: #{qnetwork_forward.1} parent=0 // pred_fallthru
    _
  // Predicated region
  $region18: #{qnetwork_forward.1} parent=0 // pred_check
    _
  $region19: #{qnetwork_forward.1} parent=0 // pred_check_branch
    %21 = sbr.rel (0) target = $region21
  $region20: #{qnetwork_forward.1} parent=0 // pred_region
    _
  $region21: #{qnetwork_forward.1} parent=0 // pred_fallthru
    _
  // Predicated region
  $region22: #{qnetwork_forward.1} parent=0 // pred_check
    _
  $region23: #{qnetwork_forward.1} parent=0 // pred_check_branch
    %23 = sbr.rel (0) target = $region25
  $region24: #{qnetwork_forward.1} parent=0 // pred_region
    _
  $region25: #{qnetwork_forward.1} parent=0 // pred_fallthru
    _
  // Predicated region
  $region26: #{qnetwork_forward.1} parent=0 // pred_check
    _
  $region27: #{qnetwork_forward.1} parent=0 // pred_check_branch
    %25 = sbr.rel (0) target = $region29
  $region28: #{qnetwork_forward.1} parent=0 // pred_region
    _
  $region29: #{qnetwork_forward.1} parent=0 // pred_fallthru
    _
  %v27 = vld [vmem:[%s0] sm:$0xff]
  %v28 = vpack.c.bf16 %v27, %v27
  %v29 = vld [vmem:[%s1] sm:$0xf]
  %v30 = vld [vmem:[%s1 + $0x4] sm:$0xf]
  %v31 = vld [vmem:[%s1 + $0x8] sm:$0xf]
  %v32 = vld [vmem:[%s1 + $0xc] sm:$0xf]
  %v33 = vld [vmem:[%s1 + $0x10] sm:$0xf]
  %v34 = vld [vmem:[%s1 + $0x14] sm:$0xf]
  %v35 = vld [vmem:[%s1 + $0x18] sm:$0xf]
  %v36 = vld [vmem:[%s1 + $0x1c] sm:$0xf]
  %v37 = vld [vmem:[%s1 + $0x20] sm:$0xf]
  %v38 = vld [vmem:[%s1 + $0x24] sm:$0xf]
  %v39 = vld [vmem:[%s1 + $0x28] sm:$0xf]
  %v40 = vld [vmem:[%s1 + $0x2c] sm:$0xf]
  %v41 = vld [vmem:[%s1 + $0x30] sm:$0xf]
  %v42 = vld [vmem:[%s1 + $0x34] sm:$0xf]
  %v43 = vld [vmem:[%s1 + $0x38] sm:$0xf]
  %v44 = vld [vmem:[%s1 + $0x3c] sm:$0xf]
  %v45 = vld [vmem:[%s1 + $0x40] sm:$0xf]
  %v46 = vld [vmem:[%s1 + $0x44] sm:$0xf]
  %v47 = vld [vmem:[%s1 + $0x48] sm:$0xf]
  %v48 = vld [vmem:[%s1 + $0x4c] sm:$0xf]
  %v49 = vld [vmem:[%s1 + $0x50] sm:$0xf]
  %v50 = vld [vmem:[%s1 + $0x54] sm:$0xf]
  %v51 = vld [vmem:[%s1 + $0x58] sm:$0xf]
  %v52 = vld [vmem:[%s1 + $0x5c] sm:$0xf]
  %v53 = vld [vmem:[%s1 + $0x60] sm:$0xf]
  %v54 = vld [vmem:[%s1 + $0x64] sm:$0xf]
  %v55 = vld [vmem:[%s1 + $0x68] sm:$0xf]
  %v56 = vld [vmem:[%s1 + $0x6c] sm:$0xf]
  %v57 = vld [vmem:[%s1 + $0x70] sm:$0xf]
  %v58 = vld [vmem:[%s1 + $0x74] sm:$0xf]
  %v59 = vld [vmem:[%s1 + $0x78] sm:$0xf]
  %v60 = vld [vmem:[%s1 + $0x7c] sm:$0xf]
  %v61 = vld [vmem:[%s1 + $0x80] sm:$0xf]
  %v62 = vld [vmem:[%s1 + $0x84] sm:$0xf]
  %v63 = vld [vmem:[%s1 + $0x88] sm:$0xf]
  %v64 = vld [vmem:[%s1 + $0x8c] sm:$0xf]
  %v65 = vld [vmem:[%s1 + $0x90] sm:$0xf]
  %v66 = vld [vmem:[%s1 + $0x94] sm:$0xf]
  %v67 = vld [vmem:[%s1 + $0x98] sm:$0xf]
  %v68 = vld [vmem:[%s1 + $0x9c] sm:$0xf]
  %v69 = vld [vmem:[%s1 + $0xa0] sm:$0xf]
  %v70 = vld [vmem:[%s1 + $0xa4] sm:$0xf]
  %v71 = vld [vmem:[%s1 + $0xa8] sm:$0xf]
  %v72 = vld [vmem:[%s1 + $0xac] sm:$0xf]
  %v73 = vld [vmem:[%s1 + $0xb0] sm:$0xf]
  %v74 = vld [vmem:[%s1 + $0xb4] sm:$0xf]
  %v75 = vld [vmem:[%s1 + $0xb8] sm:$0xf]
  %v76 = vld [vmem:[%s1 + $0xbc] sm:$0xf]
  %v77 = vld [vmem:[%s1 + $0xc0] sm:$0xf]
  %v78 = vld [vmem:[%s1 + $0xc4] sm:$0xf]
  %v79 = vld [vmem:[%s1 + $0xc8] sm:$0xf]
  %v80 = vld [vmem:[%s1 + $0xcc] sm:$0xf]
  %v81 = vld [vmem:[%s1 + $0xd0] sm:$0xf]
  %v82 = vld [vmem:[%s1 + $0xd4] sm:$0xf]
  %v83 = vld [vmem:[%s1 + $0xd8] sm:$0xf]
  %v84 = vld [vmem:[%s1 + $0xdc] sm:$0xf]
  %v85 = vld [vmem:[%s1 + $0xe0] sm:$0xf]
  %v86 = vld [vmem:[%s1 + $0xe4] sm:$0xf]
  %v87 = vld [vmem:[%s1 + $0xe8] sm:$0xf]
  %v88 = vld [vmem:[%s1 + $0xec] sm:$0xf]
  %v89 = vld [vmem:[%s1 + $0xf0] sm:$0xf]
  %v90 = vld [vmem:[%s1 + $0xf4] sm:$0xf]
  %v91 = vld [vmem:[%s1 + $0xf8] sm:$0xf]
  %v92 = vld [vmem:[%s1 + $0xfc] sm:$0xf]
  %v93 = vld [vmem:[%s2] sm:$0xff]
  %v94 = vld [vmem:[%s2 + $0x8] sm:$0xff]
  %v95 = vld [vmem:[%s2 + $0x10] sm:$0xff]
  %v96 = vld [vmem:[%s2 + $0x18] sm:$0xff]
  %v97 = vld [vmem:[%s2 + $0x20] sm:$0xff]
  %v98 = vld [vmem:[%s2 + $0x28] sm:$0xff]
  %v99 = vld [vmem:[%s2 + $0x30] sm:$0xff]
  %v100 = vld [vmem:[%s2 + $0x38] sm:$0xff]
  %v101 = vld [vmem:[%s2 + $0x40] sm:$0xff]
  %v102 = vld [vmem:[%s2 + $0x48] sm:$0xff]
  %v103 = vld [vmem:[%s2 + $0x50] sm:$0xff]
  %v104 = vld [vmem:[%s2 + $0x58] sm:$0xff]
  %v105 = vld [vmem:[%s2 + $0x60] sm:$0xff]
  %v106 = vld [vmem:[%s2 + $0x68] sm:$0xff]
  %v107 = vld [vmem:[%s2 + $0x70] sm:$0xff]
  %v108 = vld [vmem:[%s2 + $0x78] sm:$0xff]
  %v109 = vld [vmem:[%s2 + $0x80] sm:$0xff]
  %v110 = vld [vmem:[%s2 + $0x88] sm:$0xff]
  %v111 = vld [vmem:[%s2 + $0x90] sm:$0xff]
  %v112 = vld [vmem:[%s2 + $0x98] sm:$0xff]
  %v113 = vld [vmem:[%s2 + $0xa0] sm:$0xff]
  %v114 = vld [vmem:[%s2 + $0xa8] sm:$0xff]
  %v115 = vld [vmem:[%s2 + $0xb0] sm:$0xff]
  %v116 = vld [vmem:[%s2 + $0xb8] sm:$0xff]
  %v117 = vld [vmem:[%s2 + $0xc0] sm:$0xff]
  %v118 = vld [vmem:[%s2 + $0xc8] sm:$0xff]
  %v119 = vld [vmem:[%s2 + $0xd0] sm:$0xff]
  %v120 = vld [vmem:[%s2 + $0xd8] sm:$0xff]
  %v121 = vld [vmem:[%s2 + $0xe0] sm:$0xff]
  %v122 = vld [vmem:[%s2 + $0xe8] sm:$0xff]
  %v123 = vld [vmem:[%s2 + $0xf0] sm:$0xff]
  %v124 = vld [vmem:[%s2 + $0xf8] sm:$0xff]
  %v125 = vld [vmem:[%s2 + $0x100] sm:$0xff]
  %v126 = vld [vmem:[%s2 + $0x108] sm:$0xff]
  %v127 = vld [vmem:[%s2 + $0x110] sm:$0xff]
  %v128 = vld [vmem:[%s2 + $0x118] sm:$0xff]
  %v129 = vld [vmem:[%s2 + $0x120] sm:$0xff]
  %v130 = vld [vmem:[%s2 + $0x128] sm:$0xff]
  %v131 = vld [vmem:[%s2 + $0x130] sm:$0xff]
  %v132 = vld [vmem:[%s2 + $0x138] sm:$0xff]
  %v133 = vld [vmem:[%s2 + $0x140] sm:$0xff]
  %v134 = vld [vmem:[%s2 + $0x148] sm:$0xff]
  %v135 = vld [vmem:[%s2 + $0x150] sm:$0xff]
  %v136 = vld [vmem:[%s2 + $0x158] sm:$0xff]
  %v137 = vld [vmem:[%s2 + $0x160] sm:$0xff]
  %v138 = vld [vmem:[%s2 + $0x168] sm:$0xff]
  %v139 = vld [vmem:[%s2 + $0x170] sm:$0xff]
  %v140 = vld [vmem:[%s2 + $0x178] sm:$0xff]
  %v141 = vld [vmem:[%s2 + $0x180] sm:$0xff]
  %v142 = vld [vmem:[%s2 + $0x188] sm:$0xff]
  %v143 = vld [vmem:[%s2 + $0x190] sm:$0xff]
  %v144 = vld [vmem:[%s2 + $0x198] sm:$0xff]
  %v145 = vld [vmem:[%s2 + $0x1a0] sm:$0xff]
  %v146 = vld [vmem:[%s2 + $0x1a8] sm:$0xff]
  %v147 = vld [vmem:[%s2 + $0x1b0] sm:$0xff]
  %v148 = vld [vmem:[%s2 + $0x1b8] sm:$0xff]
  %v149 = vld [vmem:[%s2 + $0x1c0] sm:$0xff]
  %v150 = vld [vmem:[%s2 + $0x1c8] sm:$0xff]
  %v151 = vld [vmem:[%s2 + $0x1d0] sm:$0xff]
  %v152 = vld [vmem:[%s2 + $0x1d8] sm:$0xff]
  %v153 = vld [vmem:[%s2 + $0x1e0] sm:$0xff]
  %v154 = vld [vmem:[%s2 + $0x1e8] sm:$0xff]
  %v155 = vld [vmem:[%s2 + $0x1f0] sm:$0xff]
  %v156 = vld [vmem:[%s2 + $0x1f8] sm:$0xff]
  %158 = vset.pattern.permute.xlu0 0
  %159 = vperm.xlu0 %158, %v93
  %v160 = vpop.permute.xlu0 %159
  %163 = vset.pattern.permute.xlu0 0
  %164 = vperm.xlu0 %163, %v94
  %v165 = vpop.permute.xlu0 %164
  %168 = vset.pattern.permute.xlu0 0
  %169 = vperm.xlu0 %168, %v95
  %v170 = vpop.permute.xlu0 %169
  %173 = vset.pattern.permute.xlu0 0
  %174 = vperm.xlu0 %173, %v96
  %v175 = vpop.permute.xlu0 %174
  %178 = vset.pattern.permute.xlu0 0
  %179 = vperm.xlu0 %178, %v97
  %v180 = vpop.permute.xlu0 %179
  %183 = vset.pattern.permute.xlu0 0
  %184 = vperm.xlu0 %183, %v98
  %v185 = vpop.permute.xlu0 %184
  %188 = vset.pattern.permute.xlu0 0
  %189 = vperm.xlu0 %188, %v99
  %v190 = vpop.permute.xlu0 %189
  %193 = vset.pattern.permute.xlu0 0
  %194 = vperm.xlu0 %193, %v100
  %v195 = vpop.permute.xlu0 %194
  %198 = vset.pattern.permute.xlu0 0
  %199 = vperm.xlu0 %198, %v101
  %v200 = vpop.permute.xlu0 %199
  %203 = vset.pattern.permute.xlu0 0
  %204 = vperm.xlu0 %203, %v102
  %v205 = vpop.permute.xlu0 %204
  %208 = vset.pattern.permute.xlu0 0
  %209 = vperm.xlu0 %208, %v103
  %v210 = vpop.permute.xlu0 %209
  %213 = vset.pattern.permute.xlu0 0
  %214 = vperm.xlu0 %213, %v104
  %v215 = vpop.permute.xlu0 %214
  %218 = vset.pattern.permute.xlu0 0
  %219 = vperm.xlu0 %218, %v105
  %v220 = vpop.permute.xlu0 %219
  %223 = vset.pattern.permute.xlu0 0
  %224 = vperm.xlu0 %223, %v106
  %v225 = vpop.permute.xlu0 %224
  %228 = vset.pattern.permute.xlu0 0
  %229 = vperm.xlu0 %228, %v107
  %v230 = vpop.permute.xlu0 %229
  %233 = vset.pattern.permute.xlu0 0
  %234 = vperm.xlu0 %233, %v108
  %v235 = vpop.permute.xlu0 %234
  %238 = vset.pattern.permute.xlu0 0
  %239 = vperm.xlu0 %238, %v109
  %v240 = vpop.permute.xlu0 %239
  %243 = vset.pattern.permute.xlu0 0
  %244 = vperm.xlu0 %243, %v110
  %v245 = vpop.permute.xlu0 %244
  %248 = vset.pattern.permute.xlu0 0
  %249 = vperm.xlu0 %248, %v111
  %v250 = vpop.permute.xlu0 %249
  %253 = vset.pattern.permute.xlu0 0
  %254 = vperm.xlu0 %253, %v112
  %v255 = vpop.permute.xlu0 %254
  %258 = vset.pattern.permute.xlu0 0
  %259 = vperm.xlu0 %258, %v113
  %v260 = vpop.permute.xlu0 %259
  %263 = vset.pattern.permute.xlu0 0
  %264 = vperm.xlu0 %263, %v114
  %v265 = vpop.permute.xlu0 %264
  %268 = vset.pattern.permute.xlu0 0
  %269 = vperm.xlu0 %268, %v115
  %v270 = vpop.permute.xlu0 %269
  %273 = vset.pattern.permute.xlu0 0
  %274 = vperm.xlu0 %273, %v116
  %v275 = vpop.permute.xlu0 %274
  %278 = vset.pattern.permute.xlu0 0
  %279 = vperm.xlu0 %278, %v117
  %v280 = vpop.permute.xlu0 %279
  %283 = vset.pattern.permute.xlu0 0
  %284 = vperm.xlu0 %283, %v118
  %v285 = vpop.permute.xlu0 %284
  %288 = vset.pattern.permute.xlu0 0
  %289 = vperm.xlu0 %288, %v119
  %v290 = vpop.permute.xlu0 %289
  %293 = vset.pattern.permute.xlu0 0
  %294 = vperm.xlu0 %293, %v120
  %v295 = vpop.permute.xlu0 %294
  %298 = vset.pattern.permute.xlu0 0
  %299 = vperm.xlu0 %298, %v121
  %v300 = vpop.permute.xlu0 %299
  %303 = vset.pattern.permute.xlu0 0
  %304 = vperm.xlu0 %303, %v122
  %v305 = vpop.permute.xlu0 %304
  %308 = vset.pattern.permute.xlu0 0
  %309 = vperm.xlu0 %308, %v123
  %v310 = vpop.permute.xlu0 %309
  %313 = vset.pattern.permute.xlu0 0
  %314 = vperm.xlu0 %313, %v124
  %v315 = vpop.permute.xlu0 %314
  %318 = vset.pattern.permute.xlu0 0
  %319 = vperm.xlu0 %318, %v125
  %v320 = vpop.permute.xlu0 %319
  %323 = vset.pattern.permute.xlu0 0
  %324 = vperm.xlu0 %323, %v126
  %v325 = vpop.permute.xlu0 %324
  %328 = vset.pattern.permute.xlu0 0
  %329 = vperm.xlu0 %328, %v127
  %v330 = vpop.permute.xlu0 %329
  %333 = vset.pattern.permute.xlu0 0
  %334 = vperm.xlu0 %333, %v128
  %v335 = vpop.permute.xlu0 %334
  %338 = vset.pattern.permute.xlu0 0
  %339 = vperm.xlu0 %338, %v129
  %v340 = vpop.permute.xlu0 %339
  %343 = vset.pattern.permute.xlu0 0
  %344 = vperm.xlu0 %343, %v130
  %v345 = vpop.permute.xlu0 %344
  %348 = vset.pattern.permute.xlu0 0
  %349 = vperm.xlu0 %348, %v131
  %v350 = vpop.permute.xlu0 %349
  %353 = vset.pattern.permute.xlu0 0
  %354 = vperm.xlu0 %353, %v132
  %v355 = vpop.permute.xlu0 %354
  %358 = vset.pattern.permute.xlu0 0
  %359 = vperm.xlu0 %358, %v133
  %v360 = vpop.permute.xlu0 %359
  %363 = vset.pattern.permute.xlu0 0
  %364 = vperm.xlu0 %363, %v134
  %v365 = vpop.permute.xlu0 %364
  %368 = vset.pattern.permute.xlu0 0
  %369 = vperm.xlu0 %368, %v135
  %v370 = vpop.permute.xlu0 %369
  %373 = vset.pattern.permute.xlu0 0
  %374 = vperm.xlu0 %373, %v136
  %v375 = vpop.permute.xlu0 %374
  %378 = vset.pattern.permute.xlu0 0
  %379 = vperm.xlu0 %378, %v137
  %v380 = vpop.permute.xlu0 %379
  %383 = vset.pattern.permute.xlu0 0
  %384 = vperm.xlu0 %383, %v138
  %v385 = vpop.permute.xlu0 %384
  %388 = vset.pattern.permute.xlu0 0
  %389 = vperm.xlu0 %388, %v139
  %v390 = vpop.permute.xlu0 %389
  %393 = vset.pattern.permute.xlu0 0
  %394 = vperm.xlu0 %393, %v140
  %v395 = vpop.permute.xlu0 %394
  %398 = vset.pattern.permute.xlu0 0
  %399 = vperm.xlu0 %398, %v141
  %v400 = vpop.permute.xlu0 %399
  %403 = vset.pattern.permute.xlu0 0
  %404 = vperm.xlu0 %403, %v142
  %v405 = vpop.permute.xlu0 %404
  %408 = vset.pattern.permute.xlu0 0
  %409 = vperm.xlu0 %408, %v143
  %v410 = vpop.permute.xlu0 %409
  %413 = vset.pattern.permute.xlu0 0
  %414 = vperm.xlu0 %413, %v144
  %v415 = vpop.permute.xlu0 %414
  %418 = vset.pattern.permute.xlu0 0
  %419 = vperm.xlu0 %418, %v145
  %v420 = vpop.permute.xlu0 %419
  %423 = vset.pattern.permute.xlu0 0
  %424 = vperm.xlu0 %423, %v146
  %v425 = vpop.permute.xlu0 %424
  %428 = vset.pattern.permute.xlu0 0
  %429 = vperm.xlu0 %428, %v147
  %v430 = vpop.permute.xlu0 %429
  %433 = vset.pattern.permute.xlu0 0
  %434 = vperm.xlu0 %433, %v148
  %v435 = vpop.permute.xlu0 %434
  %438 = vset.pattern.permute.xlu0 0
  %439 = vperm.xlu0 %438, %v149
  %v440 = vpop.permute.xlu0 %439
  %443 = vset.pattern.permute.xlu0 0
  %444 = vperm.xlu0 %443, %v150
  %v445 = vpop.permute.xlu0 %444
  %448 = vset.pattern.permute.xlu0 0
  %449 = vperm.xlu0 %448, %v151
  %v450 = vpop.permute.xlu0 %449
  %453 = vset.pattern.permute.xlu0 0
  %454 = vperm.xlu0 %453, %v152
  %v455 = vpop.permute.xlu0 %454
  %458 = vset.pattern.permute.xlu0 0
  %459 = vperm.xlu0 %458, %v153
  %v460 = vpop.permute.xlu0 %459
  %463 = vset.pattern.permute.xlu0 0
  %464 = vperm.xlu0 %463, %v154
  %v465 = vpop.permute.xlu0 %464
  %468 = vset.pattern.permute.xlu0 0
  %469 = vperm.xlu0 %468, %v155
  %v470 = vpop.permute.xlu0 %469
  %473 = vset.pattern.permute.xlu0 0
  %474 = vperm.xlu0 %473, %v156
  %v475 = vpop.permute.xlu0 %474
  %v541 = vunpack.c.l.b16 %v29
  %v542 = vunpack.c.l.b16 %v30
  %v543 = vunpack.c.l.b16 %v31
  %v544 = vunpack.c.l.b16 %v32
  %v545 = vunpack.c.l.b16 %v33
  %v546 = vunpack.c.l.b16 %v34
  %v547 = vunpack.c.l.b16 %v35
  %v548 = vunpack.c.l.b16 %v36
  %v549 = vunpack.c.l.b16 %v37
  %v550 = vunpack.c.l.b16 %v38
  %v551 = vunpack.c.l.b16 %v39
  %v552 = vunpack.c.l.b16 %v40
  %v553 = vunpack.c.l.b16 %v41
  %v554 = vunpack.c.l.b16 %v42
  %v555 = vunpack.c.l.b16 %v43
  %v556 = vunpack.c.l.b16 %v44
  %v557 = vunpack.c.l.b16 %v45
  %v558 = vunpack.c.l.b16 %v46
  %v559 = vunpack.c.l.b16 %v47
  %v560 = vunpack.c.l.b16 %v48
  %v561 = vunpack.c.l.b16 %v49
  %v562 = vunpack.c.l.b16 %v50
  %v563 = vunpack.c.l.b16 %v51
  %v564 = vunpack.c.l.b16 %v52
  %v565 = vunpack.c.l.b16 %v53
  %v566 = vunpack.c.l.b16 %v54
  %v567 = vunpack.c.l.b16 %v55
  %v568 = vunpack.c.l.b16 %v56
  %v569 = vunpack.c.l.b16 %v57
  %v570 = vunpack.c.l.b16 %v58
  %v571 = vunpack.c.l.b16 %v59
  %v572 = vunpack.c.l.b16 %v60
  %v573 = vunpack.c.l.b16 %v61
  %v574 = vunpack.c.l.b16 %v62
  %v575 = vunpack.c.l.b16 %v63
  %v576 = vunpack.c.l.b16 %v64
  %v577 = vunpack.c.l.b16 %v65
  %v578 = vunpack.c.l.b16 %v66
  %v579 = vunpack.c.l.b16 %v67
  %v580 = vunpack.c.l.b16 %v68
  %v581 = vunpack.c.l.b16 %v69
  %v582 = vunpack.c.l.b16 %v70
  %v583 = vunpack.c.l.b16 %v71
  %v584 = vunpack.c.l.b16 %v72
  %v585 = vunpack.c.l.b16 %v73
  %v586 = vunpack.c.l.b16 %v74
  %v587 = vunpack.c.l.b16 %v75
  %v588 = vunpack.c.l.b16 %v76
  %v589 = vunpack.c.l.b16 %v77
  %v590 = vunpack.c.l.b16 %v78
  %v591 = vunpack.c.l.b16 %v79
  %v592 = vunpack.c.l.b16 %v80
  %v593 = vunpack.c.l.b16 %v81
  %v594 = vunpack.c.l.b16 %v82
  %v595 = vunpack.c.l.b16 %v83
  %v596 = vunpack.c.l.b16 %v84
  %v597 = vunpack.c.l.b16 %v85
  %v598 = vunpack.c.l.b16 %v86
  %v599 = vunpack.c.l.b16 %v87
  %v600 = vunpack.c.l.b16 %v88
  %v601 = vunpack.c.l.b16 %v89
  %v602 = vunpack.c.l.b16 %v90
  %v603 = vunpack.c.l.b16 %v91
  %v604 = vunpack.c.l.b16 %v92
  %v605 = vpack.c.b16 %v542, %v541
  %v606 = vpack.c.b16 %v544, %v543
  %v607 = vpack.c.b16 %v546, %v545
  %v608 = vpack.c.b16 %v548, %v547
  %v609 = vpack.c.b16 %v550, %v549
  %v610 = vpack.c.b16 %v552, %v551
  %v611 = vpack.c.b16 %v554, %v553
  %v612 = vpack.c.b16 %v556, %v555
  %v613 = vpack.c.b16 %v558, %v557
  %v614 = vpack.c.b16 %v560, %v559
  %v615 = vpack.c.b16 %v562, %v561
  %v616 = vpack.c.b16 %v564, %v563
  %v617 = vpack.c.b16 %v566, %v565
  %v618 = vpack.c.b16 %v568, %v567
  %v619 = vpack.c.b16 %v570, %v569
  %v620 = vpack.c.b16 %v572, %v571
  %v621 = vpack.c.b16 %v574, %v573
  %v622 = vpack.c.b16 %v576, %v575
  %v623 = vpack.c.b16 %v578, %v577
  %v624 = vpack.c.b16 %v580, %v579
  %v625 = vpack.c.b16 %v582, %v581
  %v626 = vpack.c.b16 %v584, %v583
  %v627 = vpack.c.b16 %v586, %v585
  %v628 = vpack.c.b16 %v588, %v587
  %v629 = vpack.c.b16 %v590, %v589
  %v630 = vpack.c.b16 %v592, %v591
  %v631 = vpack.c.b16 %v594, %v593
  %v632 = vpack.c.b16 %v596, %v595
  %v633 = vpack.c.b16 %v598, %v597
  %v634 = vpack.c.b16 %v600, %v599
  %v635 = vpack.c.b16 %v602, %v601
  %v636 = vpack.c.b16 %v604, %v603
  %vm637 = vcmask 64512
  %v639 = vsel %vm637, %v605, 0
  %v642 = vsel %vm637, %v606, 0
  %v645 = vsel %vm637, %v607, 0
  %v648 = vsel %vm637, %v608, 0
  %v651 = vsel %vm637, %v609, 0
  %v654 = vsel %vm637, %v610, 0
  %v657 = vsel %vm637, %v611, 0
  %v660 = vsel %vm637, %v612, 0
  %v663 = vsel %vm637, %v613, 0
  %v666 = vsel %vm637, %v614, 0
  %v669 = vsel %vm637, %v615, 0
  %v672 = vsel %vm637, %v616, 0
  %v675 = vsel %vm637, %v617, 0
  %v678 = vsel %vm637, %v618, 0
  %v681 = vsel %vm637, %v619, 0
  %v684 = vsel %vm637, %v620, 0
  %v687 = vsel %vm637, %v621, 0
  %v690 = vsel %vm637, %v622, 0
  %v693 = vsel %vm637, %v623, 0
  %v696 = vsel %vm637, %v624, 0
  %v699 = vsel %vm637, %v625, 0
  %v702 = vsel %vm637, %v626, 0
  %v705 = vsel %vm637, %v627, 0
  %v708 = vsel %vm637, %v628, 0
  %v711 = vsel %vm637, %v629, 0
  %v714 = vsel %vm637, %v630, 0
  %v717 = vsel %vm637, %v631, 0
  %v720 = vsel %vm637, %v632, 0
  %v723 = vsel %vm637, %v633, 0
  %v726 = vsel %vm637, %v634, 0
  %v729 = vsel %vm637, %v635, 0
  %v732 = vsel %vm637, %v636, 0
  %vm734 = vcmask 1043456
  %v736 = vsel %vm734, %v28, 0
  %738 = vmatprep.subr.bf16.mxu0 0
  %739 = vmatpush1.bf16.msra.mxu0 0
  %740 = vmatprep.subr.bf16.mxu0 0
  %741 = vmatpush1.bf16.msra.mxu0 0
  %742 = vmatprep.subr.bf16.mxu0 0
  %743 = vmatpush1.bf16.msra.mxu0 0
  %744 = vmatprep.subr.bf16.mxu0 0
  %745 = vmatpush1.bf16.msra.mxu0 0
  %746 = vmatprep.subr.bf16.mxu0 0
  %747 = vmatpush1.bf16.msra.mxu0 0
  %748 = vmatprep.subr.bf16.mxu0 0
  %749 = vmatpush1.bf16.msra.mxu0 0
  %750 = vmatprep.subr.bf16.mxu0 0
  %751 = vmatpush1.bf16.msra.mxu0 0
  %752 = vmatprep.subr.bf16.mxu0 0
  %753 = vmatpush1.bf16.msra.mxu0 %v736
  %754 = vmatprep.subr.bf16.mxu0 0
  %755 = vmatpush2.bf16.msra.mxu0 0
  %756 = vmatprep.subr.bf16.mxu0 0
  %757 = vmatpush2.bf16.msra.mxu0 0
  %758 = vmatprep.subr.bf16.mxu0 0
  %759 = vmatpush2.bf16.msra.mxu0 0
  %760 = vmatprep.subr.bf16.mxu0 0
  %761 = vmatpush2.bf16.msra.mxu0 0
  %762 = vmatprep.subr.bf16.mxu0 0
  %763 = vmatpush2.bf16.msra.mxu0 0
  %764 = vmatprep.subr.bf16.mxu0 0
  %765 = vmatpush2.bf16.msra.mxu0 0
  %766 = vmatprep.subr.bf16.mxu0 0
  %767 = vmatpush2.bf16.msra.mxu0 0
  %768 = vmatprep.subr.bf16.mxu0 0
  %769 = vmatpush2.bf16.msra.mxu0 0
  %770 = vmatprep.mubr.bf16.mxu0 0
  %771 = vmatmul.mubr.bf16.gmra.mxu0 %v639
  %v772 = vpop.f32.mrf.mxu0
  %v773 = vadd.f32 %v160, %v772
  %v774 = vpop.f32.mrf.mxu0
  %v775 = vpop.f32.mrf.mxu0
  %v776 = vadd.f32 %v165, %v775
  %v777 = vpop.f32.mrf.mxu0
  %778 = vmatprep.mubr.bf16.mxu0 0
  %779 = vmatmul.mubr.bf16.gmra.mxu0 %v642
  %v780 = vpop.f32.mrf.mxu0
  %v781 = vadd.f32 %v170, %v780
  %v782 = vpop.f32.mrf.mxu0
  %v783 = vpop.f32.mrf.mxu0
  %v784 = vadd.f32 %v175, %v783
  %v785 = vpop.f32.mrf.mxu0
  %786 = vmatprep.mubr.bf16.mxu0 0
  %787 = vmatmul.mubr.bf16.gmra.mxu0 %v645
  %v788 = vpop.f32.mrf.mxu0
  %v789 = vadd.f32 %v180, %v788
  %v790 = vpop.f32.mrf.mxu0
  %v791 = vpop.f32.mrf.mxu0
  %v792 = vadd.f32 %v185, %v791
  %v793 = vpop.f32.mrf.mxu0
  %794 = vmatprep.mubr.bf16.mxu0 0
  %795 = vmatmul.mubr.bf16.gmra.mxu0 %v648
  %v796 = vpop.f32.mrf.mxu0
  %v797 = vadd.f32 %v190, %v796
  %v798 = vpop.f32.mrf.mxu0
  %v799 = vpop.f32.mrf.mxu0
  %v800 = vadd.f32 %v195, %v799
  %v801 = vpop.f32.mrf.mxu0
  %802 = vmatprep.mubr.bf16.mxu0 0
  %803 = vmatmul.mubr.bf16.gmra.mxu0 %v651
  %v804 = vpop.f32.mrf.mxu0
  %v805 = vadd.f32 %v200, %v804
  %v806 = vpop.f32.mrf.mxu0
  %v807 = vpop.f32.mrf.mxu0
  %v808 = vadd.f32 %v205, %v807
  %v809 = vpop.f32.mrf.mxu0
  %810 = vmatprep.mubr.bf16.mxu0 0
  %811 = vmatmul.mubr.bf16.gmra.mxu0 %v654
  %v812 = vpop.f32.mrf.mxu0
  %v813 = vadd.f32 %v210, %v812
  %v814 = vpop.f32.mrf.mxu0
  %v815 = vpop.f32.mrf.mxu0
  %v816 = vadd.f32 %v215, %v815
  %v817 = vpop.f32.mrf.mxu0
  %818 = vmatprep.mubr.bf16.mxu0 0
  %819 = vmatmul.mubr.bf16.gmra.mxu0 %v657
  %v820 = vpop.f32.mrf.mxu0
  %v821 = vadd.f32 %v220, %v820
  %v822 = vpop.f32.mrf.mxu0
  %v823 = vpop.f32.mrf.mxu0
  %v824 = vadd.f32 %v225, %v823
  %v825 = vpop.f32.mrf.mxu0
  %826 = vmatprep.mubr.bf16.mxu0 0
  %827 = vmatmul.mubr.bf16.gmra.mxu0 %v660
  %v828 = vpop.f32.mrf.mxu0
  %v829 = vadd.f32 %v230, %v828
  %v830 = vpop.f32.mrf.mxu0
  %v831 = vpop.f32.mrf.mxu0
  %v832 = vadd.f32 %v235, %v831
  %v833 = vpop.f32.mrf.mxu0
  %834 = vmatprep.mubr.bf16.mxu0 0
  %835 = vmatmul.mubr.bf16.gmra.mxu0 %v663
  %v836 = vpop.f32.mrf.mxu0
  %v837 = vadd.f32 %v240, %v836
  %v838 = vpop.f32.mrf.mxu0
  %v839 = vpop.f32.mrf.mxu0
  %v840 = vadd.f32 %v245, %v839
  %v841 = vpop.f32.mrf.mxu0
  %842 = vmatprep.mubr.bf16.mxu0 0
  %843 = vmatmul.mubr.bf16.gmra.mxu0 %v666
  %v844 = vpop.f32.mrf.mxu0
  %v845 = vadd.f32 %v250, %v844
  %v846 = vpop.f32.mrf.mxu0
  %v847 = vpop.f32.mrf.mxu0
  %v848 = vadd.f32 %v255, %v847
  %v849 = vpop.f32.mrf.mxu0
  %850 = vmatprep.mubr.bf16.mxu0 0
  %851 = vmatmul.mubr.bf16.gmra.mxu0 %v669
  %v852 = vpop.f32.mrf.mxu0
  %v853 = vadd.f32 %v260, %v852
  %v854 = vpop.f32.mrf.mxu0
  %v855 = vpop.f32.mrf.mxu0
  %v856 = vadd.f32 %v265, %v855
  %v857 = vpop.f32.mrf.mxu0
  %858 = vmatprep.mubr.bf16.mxu0 0
  %859 = vmatmul.mubr.bf16.gmra.mxu0 %v672
  %v860 = vpop.f32.mrf.mxu0
  %v861 = vadd.f32 %v270, %v860
  %v862 = vpop.f32.mrf.mxu0
  %v863 = vpop.f32.mrf.mxu0
  %v864 = vadd.f32 %v275, %v863
  %v865 = vpop.f32.mrf.mxu0
  %866 = vmatprep.mubr.bf16.mxu0 0
  %867 = vmatmul.mubr.bf16.gmra.mxu0 %v675
  %v868 = vpop.f32.mrf.mxu0
  %v869 = vadd.f32 %v280, %v868
  %v870 = vpop.f32.mrf.mxu0
  %v871 = vpop.f32.mrf.mxu0
  %v872 = vadd.f32 %v285, %v871
  %v873 = vpop.f32.mrf.mxu0
  %874 = vmatprep.mubr.bf16.mxu0 0
  %875 = vmatmul.mubr.bf16.gmra.mxu0 %v678
  %v876 = vpop.f32.mrf.mxu0
  %v877 = vadd.f32 %v290, %v876
  %v878 = vpop.f32.mrf.mxu0
  %v879 = vpop.f32.mrf.mxu0
  %v880 = vadd.f32 %v295, %v879
  %v881 = vpop.f32.mrf.mxu0
  %882 = vmatprep.mubr.bf16.mxu0 0
  %883 = vmatmul.mubr.bf16.gmra.mxu0 %v681
  %v884 = vpop.f32.mrf.mxu0
  %v885 = vadd.f32 %v300, %v884
  %v886 = vpop.f32.mrf.mxu0
  %v887 = vpop.f32.mrf.mxu0
  %v888 = vadd.f32 %v305, %v887
  %v889 = vpop.f32.mrf.mxu0
  %890 = vmatprep.mubr.bf16.mxu0 0
  %891 = vmatmul.mubr.bf16.gmra.mxu0 %v684
  %v892 = vpop.f32.mrf.mxu0
  %v893 = vadd.f32 %v310, %v892
  %v894 = vpop.f32.mrf.mxu0
  %v895 = vpop.f32.mrf.mxu0
  %v896 = vadd.f32 %v315, %v895
  %v897 = vpop.f32.mrf.mxu0
  %898 = vmatprep.mubr.bf16.mxu0 0
  %899 = vmatmul.mubr.bf16.gmra.mxu0 %v687
  %v900 = vpop.f32.mrf.mxu0
  %v901 = vadd.f32 %v320, %v900
  %v902 = vpop.f32.mrf.mxu0
  %v903 = vpop.f32.mrf.mxu0
  %v904 = vadd.f32 %v325, %v903
  %v905 = vpop.f32.mrf.mxu0
  %906 = vmatprep.mubr.bf16.mxu0 0
  %907 = vmatmul.mubr.bf16.gmra.mxu0 %v690
  %v908 = vpop.f32.mrf.mxu0
  %v909 = vadd.f32 %v330, %v908
  %v910 = vpop.f32.mrf.mxu0
  %v911 = vpop.f32.mrf.mxu0
  %v912 = vadd.f32 %v335, %v911
  %v913 = vpop.f32.mrf.mxu0
  %914 = vmatprep.mubr.bf16.mxu0 0
  %915 = vmatmul.mubr.bf16.gmra.mxu0 %v693
  %v916 = vpop.f32.mrf.mxu0
  %v917 = vadd.f32 %v340, %v916
  %v918 = vpop.f32.mrf.mxu0
  %v919 = vpop.f32.mrf.mxu0
  %v920 = vadd.f32 %v345, %v919
  %v921 = vpop.f32.mrf.mxu0
  %922 = vmatprep.mubr.bf16.mxu0 0
  %923 = vmatmul.mubr.bf16.gmra.mxu0 %v696
  %v924 = vpop.f32.mrf.mxu0
  %v925 = vadd.f32 %v350, %v924
  %v926 = vpop.f32.mrf.mxu0
  %v927 = vpop.f32.mrf.mxu0
  %v928 = vadd.f32 %v355, %v927
  %v929 = vpop.f32.mrf.mxu0
  %930 = vmatprep.mubr.bf16.mxu0 0
  %931 = vmatmul.mubr.bf16.gmra.mxu0 %v699
  %v932 = vpop.f32.mrf.mxu0
  %v933 = vadd.f32 %v360, %v932
  %v934 = vpop.f32.mrf.mxu0
  %v935 = vpop.f32.mrf.mxu0
  %v936 = vadd.f32 %v365, %v935
  %v937 = vpop.f32.mrf.mxu0
  %938 = vmatprep.mubr.bf16.mxu0 0
  %939 = vmatmul.mubr.bf16.gmra.mxu0 %v702
  %v940 = vpop.f32.mrf.mxu0
  %v941 = vadd.f32 %v370, %v940
  %v942 = vpop.f32.mrf.mxu0
  %v943 = vpop.f32.mrf.mxu0
  %v944 = vadd.f32 %v375, %v943
  %v945 = vpop.f32.mrf.mxu0
  %946 = vmatprep.mubr.bf16.mxu0 0
  %947 = vmatmul.mubr.bf16.gmra.mxu0 %v705
  %v948 = vpop.f32.mrf.mxu0
  %v949 = vadd.f32 %v380, %v948
  %v950 = vpop.f32.mrf.mxu0
  %v951 = vpop.f32.mrf.mxu0
  %v952 = vadd.f32 %v385, %v951
  %v953 = vpop.f32.mrf.mxu0
  %954 = vmatprep.mubr.bf16.mxu0 0
  %955 = vmatmul.mubr.bf16.gmra.mxu0 %v708
  %v956 = vpop.f32.mrf.mxu0
  %v957 = vadd.f32 %v390, %v956
  %v958 = vpop.f32.mrf.mxu0
  %v959 = vpop.f32.mrf.mxu0
  %v960 = vadd.f32 %v395, %v959
  %v961 = vpop.f32.mrf.mxu0
  %962 = vmatprep.mubr.bf16.mxu0 0
  %963 = vmatmul.mubr.bf16.gmra.mxu0 %v711
  %v964 = vpop.f32.mrf.mxu0
  %v965 = vadd.f32 %v400, %v964
  %v966 = vpop.f32.mrf.mxu0
  %v967 = vpop.f32.mrf.mxu0
  %v968 = vadd.f32 %v405, %v967
  %v969 = vpop.f32.mrf.mxu0
  %970 = vmatprep.mubr.bf16.mxu0 0
  %971 = vmatmul.mubr.bf16.gmra.mxu0 %v714
  %v972 = vpop.f32.mrf.mxu0
  %v973 = vadd.f32 %v410, %v972
  %v974 = vpop.f32.mrf.mxu0
  %v975 = vpop.f32.mrf.mxu0
  %v976 = vadd.f32 %v415, %v975
  %v977 = vpop.f32.mrf.mxu0
  %978 = vmatprep.mubr.bf16.mxu0 0
  %979 = vmatmul.mubr.bf16.gmra.mxu0 %v717
  %v980 = vpop.f32.mrf.mxu0
  %v981 = vadd.f32 %v420, %v980
  %v982 = vpop.f32.mrf.mxu0
  %v983 = vpop.f32.mrf.mxu0
  %v984 = vadd.f32 %v425, %v983
  %v985 = vpop.f32.mrf.mxu0
  %986 = vmatprep.mubr.bf16.mxu0 0
  %987 = vmatmul.mubr.bf16.gmra.mxu0 %v720
  %v988 = vpop.f32.mrf.mxu0
  %v989 = vadd.f32 %v430, %v988
  %v990 = vpop.f32.mrf.mxu0
  %v991 = vpop.f32.mrf.mxu0
  %v992 = vadd.f32 %v435, %v991
  %v993 = vpop.f32.mrf.mxu0
  %994 = vmatprep.mubr.bf16.mxu0 0
  %995 = vmatmul.mubr.bf16.gmra.mxu0 %v723
  %v996 = vpop.f32.mrf.mxu0
  %v997 = vadd.f32 %v440, %v996
  %v998 = vpop.f32.mrf.mxu0
  %v999 = vpop.f32.mrf.mxu0
  %v1000 = vadd.f32 %v445, %v999
  %v1001 = vpop.f32.mrf.mxu0
  %1002 = vmatprep.mubr.bf16.mxu0 0
  %1003 = vmatmul.mubr.bf16.gmra.mxu0 %v726
  %v1004 = vpop.f32.mrf.mxu0
  %v1005 = vadd.f32 %v450, %v1004
  %v1006 = vpop.f32.mrf.mxu0
  %v1007 = vpop.f32.mrf.mxu0
  %v1008 = vadd.f32 %v455, %v1007
  %v1009 = vpop.f32.mrf.mxu0
  %1010 = vmatprep.mubr.bf16.mxu0 0
  %1011 = vmatmul.mubr.bf16.gmra.mxu0 %v729
  %v1012 = vpop.f32.mrf.mxu0
  %v1013 = vadd.f32 %v460, %v1012
  %v1014 = vpop.f32.mrf.mxu0
  %v1015 = vpop.f32.mrf.mxu0
  %v1016 = vadd.f32 %v465, %v1015
  %v1017 = vpop.f32.mrf.mxu0
  %1018 = vmatprep.mubr.bf16.mxu0 0
  %1019 = vmatmul.mubr.bf16.gmra.mxu0 %v732
  %v1020 = vpop.f32.mrf.mxu0
  %v1021 = vadd.f32 %v470, %v1020
  %v1022 = vpop.f32.mrf.mxu0
  %v1023 = vpop.f32.mrf.mxu0
  %v1024 = vadd.f32 %v475, %v1023
  %v1025 = vpop.f32.mrf.mxu0
  %1026 = vdwg.mxu0
  %v1027 = vmax.f32 %v773, 0.0
  %v1028 = vmax.f32 %v776, 0.0
  %v1029 = vmax.f32 %v781, 0.0
  %v1030 = vmax.f32 %v784, 0.0
  %v1031 = vmax.f32 %v789, 0.0
  %v1032 = vmax.f32 %v792, 0.0
  %v1033 = vmax.f32 %v797, 0.0
  %v1034 = vmax.f32 %v800, 0.0
  %v1035 = vmax.f32 %v805, 0.0
  %v1036 = vmax.f32 %v808, 0.0
  %v1037 = vmax.f32 %v813, 0.0
  %v1038 = vmax.f32 %v816, 0.0
  %v1039 = vmax.f32 %v821, 0.0
  %v1040 = vmax.f32 %v824, 0.0
  %v1041 = vmax.f32 %v829, 0.0
  %v1042 = vmax.f32 %v832, 0.0
  %v1043 = vmax.f32 %v837, 0.0
  %v1044 = vmax.f32 %v840, 0.0
  %v1045 = vmax.f32 %v845, 0.0
  %v1046 = vmax.f32 %v848, 0.0
  %v1047 = vmax.f32 %v853, 0.0
  %v1048 = vmax.f32 %v856, 0.0
  %v1049 = vmax.f32 %v861, 0.0
  %v1050 = vmax.f32 %v864, 0.0
  %v1051 = vmax.f32 %v869, 0.0
  %v1052 = vmax.f32 %v872, 0.0
  %v1053 = vmax.f32 %v877, 0.0
  %v1054 = vmax.f32 %v880, 0.0
  %v1055 = vmax.f32 %v885, 0.0
  %v1056 = vmax.f32 %v888, 0.0
  %v1057 = vmax.f32 %v893, 0.0
  %v1058 = vmax.f32 %v896, 0.0
  %v1059 = vmax.f32 %v901, 0.0
  %v1060 = vmax.f32 %v904, 0.0
  %v1061 = vmax.f32 %v909, 0.0
  %v1062 = vmax.f32 %v912, 0.0
  %v1063 = vmax.f32 %v917, 0.0
  %v1064 = vmax.f32 %v920, 0.0
  %v1065 = vmax.f32 %v925, 0.0
  %v1066 = vmax.f32 %v928, 0.0
  %v1067 = vmax.f32 %v933, 0.0
  %v1068 = vmax.f32 %v936, 0.0
  %v1069 = vmax.f32 %v941, 0.0
  %v1070 = vmax.f32 %v944, 0.0
  %v1071 = vmax.f32 %v949, 0.0
  %v1072 = vmax.f32 %v952, 0.0
  %v1073 = vmax.f32 %v957, 0.0
  %v1074 = vmax.f32 %v960, 0.0
  %v1075 = vmax.f32 %v965, 0.0
  %v1076 = vmax.f32 %v968, 0.0
  %v1077 = vmax.f32 %v973, 0.0
  %v1078 = vmax.f32 %v976, 0.0
  %v1079 = vmax.f32 %v981, 0.0
  %v1080 = vmax.f32 %v984, 0.0
  %v1081 = vmax.f32 %v989, 0.0
  %v1082 = vmax.f32 %v992, 0.0
  %v1083 = vmax.f32 %v997, 0.0
  %v1084 = vmax.f32 %v1000, 0.0
  %v1085 = vmax.f32 %v1005, 0.0
  %v1086 = vmax.f32 %v1008, 0.0
  %v1087 = vmax.f32 %v1013, 0.0
  %v1088 = vmax.f32 %v1016, 0.0
  %v1089 = vmax.f32 %v1021, 0.0
  %v1090 = vmax.f32 %v1024, 0.0
  %v1091 = vld [vmem:[%s3] sm:$0xff]
  %v1092 = vld [vmem:[%s3 + $0x8] sm:$0xff]
  %v1093 = vld [vmem:[%s3 + $0x10] sm:$0xff]
  %v1094 = vld [vmem:[%s3 + $0x18] sm:$0xff]
  %v1095 = vld [vmem:[%s3 + $0x20] sm:$0xff]
  %v1096 = vld [vmem:[%s3 + $0x28] sm:$0xff]
  %v1097 = vld [vmem:[%s3 + $0x30] sm:$0xff]
  %v1098 = vld [vmem:[%s3 + $0x38] sm:$0xff]
  %v1099 = vld [vmem:[%s3 + $0x40] sm:$0xff]
  %v1100 = vld [vmem:[%s3 + $0x48] sm:$0xff]
  %v1101 = vld [vmem:[%s3 + $0x50] sm:$0xff]
  %v1102 = vld [vmem:[%s3 + $0x58] sm:$0xff]
  %v1103 = vld [vmem:[%s3 + $0x60] sm:$0xff]
  %v1104 = vld [vmem:[%s3 + $0x68] sm:$0xff]
  %v1105 = vld [vmem:[%s3 + $0x70] sm:$0xff]
  %v1106 = vld [vmem:[%s3 + $0x78] sm:$0xff]
  %v1107 = vld [vmem:[%s3 + $0x80] sm:$0xff]
  %v1108 = vld [vmem:[%s3 + $0x88] sm:$0xff]
  %v1109 = vld [vmem:[%s3 + $0x90] sm:$0xff]
  %v1110 = vld [vmem:[%s3 + $0x98] sm:$0xff]
  %v1111 = vld [vmem:[%s3 + $0xa0] sm:$0xff]
  %v1112 = vld [vmem:[%s3 + $0xa8] sm:$0xff]
  %v1113 = vld [vmem:[%s3 + $0xb0] sm:$0xff]
  %v1114 = vld [vmem:[%s3 + $0xb8] sm:$0xff]
  %v1115 = vld [vmem:[%s3 + $0xc0] sm:$0xff]
  %v1116 = vld [vmem:[%s3 + $0xc8] sm:$0xff]
  %v1117 = vld [vmem:[%s3 + $0xd0] sm:$0xff]
  %v1118 = vld [vmem:[%s3 + $0xd8] sm:$0xff]
  %v1119 = vld [vmem:[%s3 + $0xe0] sm:$0xff]
  %v1120 = vld [vmem:[%s3 + $0xe8] sm:$0xff]
  %v1121 = vld [vmem:[%s3 + $0xf0] sm:$0xff]
  %v1122 = vld [vmem:[%s3 + $0xf8] sm:$0xff]
  %v1123 = vld [vmem:[%s3 + $0x100] sm:$0xff]
  %v1124 = vld [vmem:[%s3 + $0x108] sm:$0xff]
  %v1125 = vld [vmem:[%s3 + $0x110] sm:$0xff]
  %v1126 = vld [vmem:[%s3 + $0x118] sm:$0xff]
  %v1127 = vld [vmem:[%s3 + $0x120] sm:$0xff]
  %v1128 = vld [vmem:[%s3 + $0x128] sm:$0xff]
  %v1129 = vld [vmem:[%s3 + $0x130] sm:$0xff]
  %v1130 = vld [vmem:[%s3 + $0x138] sm:$0xff]
  %v1131 = vld [vmem:[%s3 + $0x140] sm:$0xff]
  %v1132 = vld [vmem:[%s3 + $0x148] sm:$0xff]
  %v1133 = vld [vmem:[%s3 + $0x150] sm:$0xff]
  %v1134 = vld [vmem:[%s3 + $0x158] sm:$0xff]
  %v1135 = vld [vmem:[%s3 + $0x160] sm:$0xff]
  %v1136 = vld [vmem:[%s3 + $0x168] sm:$0xff]
  %v1137 = vld [vmem:[%s3 + $0x170] sm:$0xff]
  %v1138 = vld [vmem:[%s3 + $0x178] sm:$0xff]
  %v1139 = vld [vmem:[%s3 + $0x180] sm:$0xff]
  %v1140 = vld [vmem:[%s3 + $0x188] sm:$0xff]
  %v1141 = vld [vmem:[%s3 + $0x190] sm:$0xff]
  %v1142 = vld [vmem:[%s3 + $0x198] sm:$0xff]
  %v1143 = vld [vmem:[%s3 + $0x1a0] sm:$0xff]
  %v1144 = vld [vmem:[%s3 + $0x1a8] sm:$0xff]
  %v1145 = vld [vmem:[%s3 + $0x1b0] sm:$0xff]
  %v1146 = vld [vmem:[%s3 + $0x1b8] sm:$0xff]
  %v1147 = vld [vmem:[%s3 + $0x1c0] sm:$0xff]
  %v1148 = vld [vmem:[%s3 + $0x1c8] sm:$0xff]
  %v1149 = vld [vmem:[%s3 + $0x1d0] sm:$0xff]
  %v1150 = vld [vmem:[%s3 + $0x1d8] sm:$0xff]
  %v1151 = vld [vmem:[%s3 + $0x1e0] sm:$0xff]
  %v1152 = vld [vmem:[%s3 + $0x1e8] sm:$0xff]
  %v1153 = vld [vmem:[%s3 + $0x1f0] sm:$0xff]
  %v1154 = vld [vmem:[%s3 + $0x1f8] sm:$0xff]
  %v1155 = vpack.c.bf16 %v1028, %v1027
  %v1156 = vpack.c.bf16 %v1030, %v1029
  %v1157 = vpack.c.bf16 %v1032, %v1031
  %v1158 = vpack.c.bf16 %v1034, %v1033
  %v1159 = vpack.c.bf16 %v1036, %v1035
  %v1160 = vpack.c.bf16 %v1038, %v1037
  %v1161 = vpack.c.bf16 %v1040, %v1039
  %v1162 = vpack.c.bf16 %v1042, %v1041
  %v1163 = vpack.c.bf16 %v1044, %v1043
  %v1164 = vpack.c.bf16 %v1046, %v1045
  %v1165 = vpack.c.bf16 %v1048, %v1047
  %v1166 = vpack.c.bf16 %v1050, %v1049
  %v1167 = vpack.c.bf16 %v1052, %v1051
  %v1168 = vpack.c.bf16 %v1054, %v1053
  %v1169 = vpack.c.bf16 %v1056, %v1055
  %v1170 = vpack.c.bf16 %v1058, %v1057
  %v1171 = vpack.c.bf16 %v1060, %v1059
  %v1172 = vpack.c.bf16 %v1062, %v1061
  %v1173 = vpack.c.bf16 %v1064, %v1063
  %v1174 = vpack.c.bf16 %v1066, %v1065
  %v1175 = vpack.c.bf16 %v1068, %v1067
  %v1176 = vpack.c.bf16 %v1070, %v1069
  %v1177 = vpack.c.bf16 %v1072, %v1071
  %v1178 = vpack.c.bf16 %v1074, %v1073
  %v1179 = vpack.c.bf16 %v1076, %v1075
  %v1180 = vpack.c.bf16 %v1078, %v1077
  %v1181 = vpack.c.bf16 %v1080, %v1079
  %v1182 = vpack.c.bf16 %v1082, %v1081
  %v1183 = vpack.c.bf16 %v1084, %v1083
  %v1184 = vpack.c.bf16 %v1086, %v1085
  %v1185 = vpack.c.bf16 %v1088, %v1087
  %v1186 = vpack.c.bf16 %v1090, %v1089
  %v1187 = vld [vmem:[%s4] sm:$0xff]
  %v1188 = vld [vmem:[%s4 + $0x8] sm:$0xff]
  %v1189 = vld [vmem:[%s4 + $0x10] sm:$0xff]
  %v1190 = vld [vmem:[%s4 + $0x18] sm:$0xff]
  %v1191 = vld [vmem:[%s4 + $0x20] sm:$0xff]
  %v1192 = vld [vmem:[%s4 + $0x28] sm:$0xff]
  %v1193 = vld [vmem:[%s4 + $0x30] sm:$0xff]
  %v1194 = vld [vmem:[%s4 + $0x38] sm:$0xff]
  %v1195 = vld [vmem:[%s4 + $0x40] sm:$0xff]
  %v1196 = vld [vmem:[%s4 + $0x48] sm:$0xff]
  %v1197 = vld [vmem:[%s4 + $0x50] sm:$0xff]
  %v1198 = vld [vmem:[%s4 + $0x58] sm:$0xff]
  %v1199 = vld [vmem:[%s4 + $0x60] sm:$0xff]
  %v1200 = vld [vmem:[%s4 + $0x68] sm:$0xff]
  %v1201 = vld [vmem:[%s4 + $0x70] sm:$0xff]
  %v1202 = vld [vmem:[%s4 + $0x78] sm:$0xff]
  %v1203 = vld [vmem:[%s4 + $0x80] sm:$0xff]
  %v1204 = vld [vmem:[%s4 + $0x88] sm:$0xff]
  %v1205 = vld [vmem:[%s4 + $0x90] sm:$0xff]
  %v1206 = vld [vmem:[%s4 + $0x98] sm:$0xff]
  %v1207 = vld [vmem:[%s4 + $0xa0] sm:$0xff]
  %v1208 = vld [vmem:[%s4 + $0xa8] sm:$0xff]
  %v1209 = vld [vmem:[%s4 + $0xb0] sm:$0xff]
  %v1210 = vld [vmem:[%s4 + $0xb8] sm:$0xff]
  %v1211 = vld [vmem:[%s4 + $0xc0] sm:$0xff]
  %v1212 = vld [vmem:[%s4 + $0xc8] sm:$0xff]
  %v1213 = vld [vmem:[%s4 + $0xd0] sm:$0xff]
  %v1214 = vld [vmem:[%s4 + $0xd8] sm:$0xff]
  %v1215 = vld [vmem:[%s4 + $0xe0] sm:$0xff]
  %v1216 = vld [vmem:[%s4 + $0xe8] sm:$0xff]
  %v1217 = vld [vmem:[%s4 + $0xf0] sm:$0xff]
  %v1218 = vld [vmem:[%s4 + $0xf8] sm:$0xff]
  %1220 = vset.pattern.permute.xlu0 0
  %1221 = vperm.xlu0 %1220, %v1187
  %v1222 = vpop.permute.xlu0 %1221
  %1225 = vset.pattern.permute.xlu0 0
  %1226 = vperm.xlu0 %1225, %v1188
  %v1227 = vpop.permute.xlu0 %1226
  %1230 = vset.pattern.permute.xlu0 0
  %1231 = vperm.xlu0 %1230, %v1189
  %v1232 = vpop.permute.xlu0 %1231
  %1235 = vset.pattern.permute.xlu0 0
  %1236 = vperm.xlu0 %1235, %v1190
  %v1237 = vpop.permute.xlu0 %1236
  %1240 = vset.pattern.permute.xlu0 0
  %1241 = vperm.xlu0 %1240, %v1191
  %v1242 = vpop.permute.xlu0 %1241
  %1245 = vset.pattern.permute.xlu0 0
  %1246 = vperm.xlu0 %1245, %v1192
  %v1247 = vpop.permute.xlu0 %1246
  %1250 = vset.pattern.permute.xlu0 0
  %1251 = vperm.xlu0 %1250, %v1193
  %v1252 = vpop.permute.xlu0 %1251
  %1255 = vset.pattern.permute.xlu0 0
  %1256 = vperm.xlu0 %1255, %v1194
  %v1257 = vpop.permute.xlu0 %1256
  %1260 = vset.pattern.permute.xlu0 0
  %1261 = vperm.xlu0 %1260, %v1195
  %v1262 = vpop.permute.xlu0 %1261
  %1265 = vset.pattern.permute.xlu0 0
  %1266 = vperm.xlu0 %1265, %v1196
  %v1267 = vpop.permute.xlu0 %1266
  %1270 = vset.pattern.permute.xlu0 0
  %1271 = vperm.xlu0 %1270, %v1197
  %v1272 = vpop.permute.xlu0 %1271
  %1275 = vset.pattern.permute.xlu0 0
  %1276 = vperm.xlu0 %1275, %v1198
  %v1277 = vpop.permute.xlu0 %1276
  %1280 = vset.pattern.permute.xlu0 0
  %1281 = vperm.xlu0 %1280, %v1199
  %v1282 = vpop.permute.xlu0 %1281
  %1285 = vset.pattern.permute.xlu0 0
  %1286 = vperm.xlu0 %1285, %v1200
  %v1287 = vpop.permute.xlu0 %1286
  %1290 = vset.pattern.permute.xlu0 0
  %1291 = vperm.xlu0 %1290, %v1201
  %v1292 = vpop.permute.xlu0 %1291
  %1295 = vset.pattern.permute.xlu0 0
  %1296 = vperm.xlu0 %1295, %v1202
  %v1297 = vpop.permute.xlu0 %1296
  %1300 = vset.pattern.permute.xlu0 0
  %1301 = vperm.xlu0 %1300, %v1203
  %v1302 = vpop.permute.xlu0 %1301
  %1305 = vset.pattern.permute.xlu0 0
  %1306 = vperm.xlu0 %1305, %v1204
  %v1307 = vpop.permute.xlu0 %1306
  %1310 = vset.pattern.permute.xlu0 0
  %1311 = vperm.xlu0 %1310, %v1205
  %v1312 = vpop.permute.xlu0 %1311
  %1315 = vset.pattern.permute.xlu0 0
  %1316 = vperm.xlu0 %1315, %v1206
  %v1317 = vpop.permute.xlu0 %1316
  %1320 = vset.pattern.permute.xlu0 0
  %1321 = vperm.xlu0 %1320, %v1207
  %v1322 = vpop.permute.xlu0 %1321
  %1325 = vset.pattern.permute.xlu0 0
  %1326 = vperm.xlu0 %1325, %v1208
  %v1327 = vpop.permute.xlu0 %1326
  %1330 = vset.pattern.permute.xlu0 0
  %1331 = vperm.xlu0 %1330, %v1209
  %v1332 = vpop.permute.xlu0 %1331
  %1335 = vset.pattern.permute.xlu0 0
  %1336 = vperm.xlu0 %1335, %v1210
  %v1337 = vpop.permute.xlu0 %1336
  %1340 = vset.pattern.permute.xlu0 0
  %1341 = vperm.xlu0 %1340, %v1211
  %v1342 = vpop.permute.xlu0 %1341
  %1345 = vset.pattern.permute.xlu0 0
  %1346 = vperm.xlu0 %1345, %v1212
  %v1347 = vpop.permute.xlu0 %1346
  %1350 = vset.pattern.permute.xlu0 0
  %1351 = vperm.xlu0 %1350, %v1213
  %v1352 = vpop.permute.xlu0 %1351
  %1355 = vset.pattern.permute.xlu0 0
  %1356 = vperm.xlu0 %1355, %v1214
  %v1357 = vpop.permute.xlu0 %1356
  %1360 = vset.pattern.permute.xlu0 0
  %1361 = vperm.xlu0 %1360, %v1215
  %v1362 = vpop.permute.xlu0 %1361
  %1365 = vset.pattern.permute.xlu0 0
  %1366 = vperm.xlu0 %1365, %v1216
  %v1367 = vpop.permute.xlu0 %1366
  %1370 = vset.pattern.permute.xlu0 0
  %1371 = vperm.xlu0 %1370, %v1217
  %v1372 = vpop.permute.xlu0 %1371
  %1375 = vset.pattern.permute.xlu0 0
  %1376 = vperm.xlu0 %1375, %v1218
  %v1377 = vpop.permute.xlu0 %1376
  %v1443 = vunpack.c.l.b16 %v1091
  %v1444 = vunpack.c.h.b16 %v1091
  %v1445 = vunpack.c.l.b16 %v1092
  %v1446 = vunpack.c.h.b16 %v1092
  %v1447 = vunpack.c.l.b16 %v1093
  %v1448 = vunpack.c.h.b16 %v1093
  %v1449 = vunpack.c.l.b16 %v1094
  %v1450 = vunpack.c.h.b16 %v1094
  %v1451 = vunpack.c.l.b16 %v1095
  %v1452 = vunpack.c.h.b16 %v1095
  %v1453 = vunpack.c.l.b16 %v1096
  %v1454 = vunpack.c.h.b16 %v1096
  %v1455 = vunpack.c.l.b16 %v1097
  %v1456 = vunpack.c.h.b16 %v1097
  %v1457 = vunpack.c.l.b16 %v1098
  %v1458 = vunpack.c.h.b16 %v1098
  %v1459 = vunpack.c.l.b16 %v1099
  %v1460 = vunpack.c.h.b16 %v1099
  %v1461 = vunpack.c.l.b16 %v1100
  %v1462 = vunpack.c.h.b16 %v1100
  %v1463 = vunpack.c.l.b16 %v1101
  %v1464 = vunpack.c.h.b16 %v1101
  %v1465 = vunpack.c.l.b16 %v1102
  %v1466 = vunpack.c.h.b16 %v1102
  %v1467 = vunpack.c.l.b16 %v1103
  %v1468 = vunpack.c.h.b16 %v1103
  %v1469 = vunpack.c.l.b16 %v1104
  %v1470 = vunpack.c.h.b16 %v1104
  %v1471 = vunpack.c.l.b16 %v1105
  %v1472 = vunpack.c.h.b16 %v1105
  %v1473 = vunpack.c.l.b16 %v1106
  %v1474 = vunpack.c.h.b16 %v1106
  %v1475 = vunpack.c.l.b16 %v1107
  %v1476 = vunpack.c.h.b16 %v1107
  %v1477 = vunpack.c.l.b16 %v1108
  %v1478 = vunpack.c.h.b16 %v1108
  %v1479 = vunpack.c.l.b16 %v1109
  %v1480 = vunpack.c.h.b16 %v1109
  %v1481 = vunpack.c.l.b16 %v1110
  %v1482 = vunpack.c.h.b16 %v1110
  %v1483 = vunpack.c.l.b16 %v1111
  %v1484 = vunpack.c.h.b16 %v1111
  %v1485 = vunpack.c.l.b16 %v1112
  %v1486 = vunpack.c.h.b16 %v1112
  %v1487 = vunpack.c.l.b16 %v1113
  %v1488 = vunpack.c.h.b16 %v1113
  %v1489 = vunpack.c.l.b16 %v1114
  %v1490 = vunpack.c.h.b16 %v1114
  %v1491 = vunpack.c.l.b16 %v1115
  %v1492 = vunpack.c.h.b16 %v1115
  %v1493 = vunpack.c.l.b16 %v1116
  %v1494 = vunpack.c.h.b16 %v1116
  %v1495 = vunpack.c.l.b16 %v1117
  %v1496 = vunpack.c.h.b16 %v1117
  %v1497 = vunpack.c.l.b16 %v1118
  %v1498 = vunpack.c.h.b16 %v1118
  %v1499 = vunpack.c.l.b16 %v1119
  %v1500 = vunpack.c.h.b16 %v1119
  %v1501 = vunpack.c.l.b16 %v1120
  %v1502 = vunpack.c.h.b16 %v1120
  %v1503 = vunpack.c.l.b16 %v1121
  %v1504 = vunpack.c.h.b16 %v1121
  %v1505 = vunpack.c.l.b16 %v1122
  %v1506 = vunpack.c.h.b16 %v1122
  %v1507 = vunpack.c.l.b16 %v1123
  %v1508 = vunpack.c.h.b16 %v1123
  %v1509 = vunpack.c.l.b16 %v1124
  %v1510 = vunpack.c.h.b16 %v1124
  %v1511 = vunpack.c.l.b16 %v1125
  %v1512 = vunpack.c.h.b16 %v1125
  %v1513 = vunpack.c.l.b16 %v1126
  %v1514 = vunpack.c.h.b16 %v1126
  %v1515 = vunpack.c.l.b16 %v1127
  %v1516 = vunpack.c.h.b16 %v1127
  %v1517 = vunpack.c.l.b16 %v1128
  %v1518 = vunpack.c.h.b16 %v1128
  %v1519 = vunpack.c.l.b16 %v1129
  %v1520 = vunpack.c.h.b16 %v1129
  %v1521 = vunpack.c.l.b16 %v1130
  %v1522 = vunpack.c.h.b16 %v1130
  %v1523 = vunpack.c.l.b16 %v1131
  %v1524 = vunpack.c.h.b16 %v1131
  %v1525 = vunpack.c.l.b16 %v1132
  %v1526 = vunpack.c.h.b16 %v1132
  %v1527 = vunpack.c.l.b16 %v1133
  %v1528 = vunpack.c.h.b16 %v1133
  %v1529 = vunpack.c.l.b16 %v1134
  %v1530 = vunpack.c.h.b16 %v1134
  %v1531 = vunpack.c.l.b16 %v1135
  %v1532 = vunpack.c.h.b16 %v1135
  %v1533 = vunpack.c.l.b16 %v1136
  %v1534 = vunpack.c.h.b16 %v1136
  %v1535 = vunpack.c.l.b16 %v1137
  %v1536 = vunpack.c.h.b16 %v1137
  %v1537 = vunpack.c.l.b16 %v1138
  %v1538 = vunpack.c.h.b16 %v1138
  %v1539 = vunpack.c.l.b16 %v1139
  %v1540 = vunpack.c.h.b16 %v1139
  %v1541 = vunpack.c.l.b16 %v1140
  %v1542 = vunpack.c.h.b16 %v1140
  %v1543 = vunpack.c.l.b16 %v1141
  %v1544 = vunpack.c.h.b16 %v1141
  %v1545 = vunpack.c.l.b16 %v1142
  %v1546 = vunpack.c.h.b16 %v1142
  %v1547 = vunpack.c.l.b16 %v1143
  %v1548 = vunpack.c.h.b16 %v1143
  %v1549 = vunpack.c.l.b16 %v1144
  %v1550 = vunpack.c.h.b16 %v1144
  %v1551 = vunpack.c.l.b16 %v1145
  %v1552 = vunpack.c.h.b16 %v1145
  %v1553 = vunpack.c.l.b16 %v1146
  %v1554 = vunpack.c.h.b16 %v1146
  %v1555 = vunpack.c.l.b16 %v1147
  %v1556 = vunpack.c.h.b16 %v1147
  %v1557 = vunpack.c.l.b16 %v1148
  %v1558 = vunpack.c.h.b16 %v1148
  %v1559 = vunpack.c.l.b16 %v1149
  %v1560 = vunpack.c.h.b16 %v1149
  %v1561 = vunpack.c.l.b16 %v1150
  %v1562 = vunpack.c.h.b16 %v1150
  %v1563 = vunpack.c.l.b16 %v1151
  %v1564 = vunpack.c.h.b16 %v1151
  %v1565 = vunpack.c.l.b16 %v1152
  %v1566 = vunpack.c.h.b16 %v1152
  %v1567 = vunpack.c.l.b16 %v1153
  %v1568 = vunpack.c.h.b16 %v1153
  %v1569 = vunpack.c.l.b16 %v1154
  %v1570 = vunpack.c.h.b16 %v1154
  %v1571 = vpack.c.b16 %v1447, %v1443
  %v1572 = vpack.c.b16 %v1448, %v1444
  %v1573 = vpack.c.b16 %v1449, %v1445
  %v1574 = vpack.c.b16 %v1450, %v1446
  %v1575 = vpack.c.b16 %v1455, %v1451
  %v1576 = vpack.c.b16 %v1456, %v1452
  %v1577 = vpack.c.b16 %v1457, %v1453
  %v1578 = vpack.c.b16 %v1458, %v1454
  %v1579 = vpack.c.b16 %v1463, %v1459
  %v1580 = vpack.c.b16 %v1464, %v1460
  %v1581 = vpack.c.b16 %v1465, %v1461
  %v1582 = vpack.c.b16 %v1466, %v1462
  %v1583 = vpack.c.b16 %v1471, %v1467
  %v1584 = vpack.c.b16 %v1472, %v1468
  %v1585 = vpack.c.b16 %v1473, %v1469
  %v1586 = vpack.c.b16 %v1474, %v1470
  %v1587 = vpack.c.b16 %v1479, %v1475
  %v1588 = vpack.c.b16 %v1480, %v1476
  %v1589 = vpack.c.b16 %v1481, %v1477
  %v1590 = vpack.c.b16 %v1482, %v1478
  %v1591 = vpack.c.b16 %v1487, %v1483
  %v1592 = vpack.c.b16 %v1488, %v1484
  %v1593 = vpack.c.b16 %v1489, %v1485
  %v1594 = vpack.c.b16 %v1490, %v1486
  %v1595 = vpack.c.b16 %v1495, %v1491
  %v1596 = vpack.c.b16 %v1496, %v1492
  %v1597 = vpack.c.b16 %v1497, %v1493
  %v1598 = vpack.c.b16 %v1498, %v1494
  %v1599 = vpack.c.b16 %v1503, %v1499
  %v1600 = vpack.c.b16 %v1504, %v1500
  %v1601 = vpack.c.b16 %v1505, %v1501
  %v1602 = vpack.c.b16 %v1506, %v1502
  %v1603 = vpack.c.b16 %v1511, %v1507
  %v1604 = vpack.c.b16 %v1512, %v1508
  %v1605 = vpack.c.b16 %v1513, %v1509
  %v1606 = vpack.c.b16 %v1514, %v1510
  %v1607 = vpack.c.b16 %v1519, %v1515
  %v1608 = vpack.c.b16 %v1520, %v1516
  %v1609 = vpack.c.b16 %v1521, %v1517
  %v1610 = vpack.c.b16 %v1522, %v1518
  %v1611 = vpack.c.b16 %v1527, %v1523
  %v1612 = vpack.c.b16 %v1528, %v1524
  %v1613 = vpack.c.b16 %v1529, %v1525
  %v1614 = vpack.c.b16 %v1530, %v1526
  %v1615 = vpack.c.b16 %v1535, %v1531
  %v1616 = vpack.c.b16 %v1536, %v1532
  %v1617 = vpack.c.b16 %v1537, %v1533
  %v1618 = vpack.c.b16 %v1538, %v1534
  %v1619 = vpack.c.b16 %v1543, %v1539
  %v1620 = vpack.c.b16 %v1544, %v1540
  %v1621 = vpack.c.b16 %v1545, %v1541
  %v1622 = vpack.c.b16 %v1546, %v1542
  %v1623 = vpack.c.b16 %v1551, %v1547
  %v1624 = vpack.c.b16 %v1552, %v1548
  %v1625 = vpack.c.b16 %v1553, %v1549
  %v1626 = vpack.c.b16 %v1554, %v1550
  %v1627 = vpack.c.b16 %v1559, %v1555
  %v1628 = vpack.c.b16 %v1560, %v1556
  %v1629 = vpack.c.b16 %v1561, %v1557
  %v1630 = vpack.c.b16 %v1562, %v1558
  %v1631 = vpack.c.b16 %v1567, %v1563
  %v1632 = vpack.c.b16 %v1568, %v1564
  %v1633 = vpack.c.b16 %v1569, %v1565
  %v1634 = vpack.c.b16 %v1570, %v1566
  %1699 = vmatprep.subr.bf16.mxu0 0
  %1700 = vmatpush1.bf16.msra.mxu0 %v1162
  %1701 = vmatprep.subr.bf16.mxu0 0
  %1702 = vmatpush1.bf16.msra.mxu0 %v1161
  %1703 = vmatprep.subr.bf16.mxu0 0
  %1704 = vmatpush1.bf16.msra.mxu0 %v1160
  %1705 = vmatprep.subr.bf16.mxu0 0
  %1706 = vmatpush1.bf16.msra.mxu0 %v1159
  %1707 = vmatprep.subr.bf16.mxu0 0
  %1708 = vmatpush1.bf16.msra.mxu0 %v1158
  %1709 = vmatprep.subr.bf16.mxu0 0
  %1710 = vmatpush1.bf16.msra.mxu0 %v1157
  %1711 = vmatprep.subr.bf16.mxu0 0
  %1712 = vmatpush1.bf16.msra.mxu0 %v1156
  %1713 = vmatprep.subr.bf16.mxu0 0
  %1714 = vmatpush1.bf16.msra.mxu0 %v1155
  %1715 = vmatprep.subr.bf16.mxu0 0
  %1716 = vmatpush2.bf16.msra.mxu0 %v1170
  %1717 = vmatprep.subr.bf16.mxu0 0
  %1718 = vmatpush2.bf16.msra.mxu0 %v1169
  %1719 = vmatprep.subr.bf16.mxu0 0
  %1720 = vmatpush2.bf16.msra.mxu0 %v1168
  %1721 = vmatprep.subr.bf16.mxu0 0
  %1722 = vmatpush2.bf16.msra.mxu0 %v1167
  %1723 = vmatprep.subr.bf16.mxu0 0
  %1724 = vmatpush2.bf16.msra.mxu0 %v1166
  %1725 = vmatprep.subr.bf16.mxu0 0
  %1726 = vmatpush2.bf16.msra.mxu0 %v1165
  %1727 = vmatprep.subr.bf16.mxu0 0
  %1728 = vmatpush2.bf16.msra.mxu0 %v1164
  %1729 = vmatprep.subr.bf16.mxu0 0
  %1730 = vmatpush2.bf16.msra.mxu0 %v1163
  %1731 = vmatprep.mubr.bf16.mxu0 %v1572
  %1732 = vmatmul.mubr.bf16.gmra.mxu0 %v1571
  %v1733 = vpop.f32.mrf.mxu0
  %v1734 = vadd.f32 %v1222, %v1733
  %v1735 = vpop.f32.mrf.mxu0
  %v1736 = vpop.f32.mrf.mxu0
  %v1737 = vadd.f32 %v1227, %v1736
  %v1738 = vpop.f32.mrf.mxu0
  %1739 = vmatprep.mubr.bf16.mxu0 %v1576
  %1740 = vmatmul.mubr.bf16.gmra.mxu0 %v1575
  %v1741 = vpop.f32.mrf.mxu0
  %v1742 = vadd.f32 %v1232, %v1741
  %v1743 = vpop.f32.mrf.mxu0
  %v1744 = vpop.f32.mrf.mxu0
  %v1745 = vadd.f32 %v1237, %v1744
  %v1746 = vpop.f32.mrf.mxu0
  %1747 = vmatprep.mubr.bf16.mxu0 %v1580
  %1748 = vmatmul.mubr.bf16.gmra.mxu0 %v1579
  %v1749 = vpop.f32.mrf.mxu0
  %v1750 = vadd.f32 %v1242, %v1749
  %v1751 = vpop.f32.mrf.mxu0
  %v1752 = vpop.f32.mrf.mxu0
  %v1753 = vadd.f32 %v1247, %v1752
  %v1754 = vpop.f32.mrf.mxu0
  %1755 = vmatprep.mubr.bf16.mxu0 %v1584
  %1756 = vmatmul.mubr.bf16.gmra.mxu0 %v1583
  %v1757 = vpop.f32.mrf.mxu0
  %v1758 = vadd.f32 %v1252, %v1757
  %v1759 = vpop.f32.mrf.mxu0
  %v1760 = vpop.f32.mrf.mxu0
  %v1761 = vadd.f32 %v1257, %v1760
  %v1762 = vpop.f32.mrf.mxu0
  %1763 = vmatprep.mubr.bf16.mxu0 %v1588
  %1764 = vmatmul.mubr.bf16.gmra.mxu0 %v1587
  %v1765 = vpop.f32.mrf.mxu0
  %v1766 = vadd.f32 %v1262, %v1765
  %v1767 = vpop.f32.mrf.mxu0
  %v1768 = vpop.f32.mrf.mxu0
  %v1769 = vadd.f32 %v1267, %v1768
  %v1770 = vpop.f32.mrf.mxu0
  %1771 = vmatprep.mubr.bf16.mxu0 %v1592
  %1772 = vmatmul.mubr.bf16.gmra.mxu0 %v1591
  %v1773 = vpop.f32.mrf.mxu0
  %v1774 = vadd.f32 %v1272, %v1773
  %v1775 = vpop.f32.mrf.mxu0
  %v1776 = vpop.f32.mrf.mxu0
  %v1777 = vadd.f32 %v1277, %v1776
  %v1778 = vpop.f32.mrf.mxu0
  %1779 = vmatprep.mubr.bf16.mxu0 %v1596
  %1780 = vmatmul.mubr.bf16.gmra.mxu0 %v1595
  %v1781 = vpop.f32.mrf.mxu0
  %v1782 = vadd.f32 %v1282, %v1781
  %v1783 = vpop.f32.mrf.mxu0
  %v1784 = vpop.f32.mrf.mxu0
  %v1785 = vadd.f32 %v1287, %v1784
  %v1786 = vpop.f32.mrf.mxu0
  %1787 = vmatprep.mubr.bf16.mxu0 %v1600
  %1788 = vmatmul.mubr.bf16.gmra.mxu0 %v1599
  %v1789 = vpop.f32.mrf.mxu0
  %v1790 = vadd.f32 %v1292, %v1789
  %v1791 = vpop.f32.mrf.mxu0
  %v1792 = vpop.f32.mrf.mxu0
  %v1793 = vadd.f32 %v1297, %v1792
  %v1794 = vpop.f32.mrf.mxu0
  %1795 = vmatprep.mubr.bf16.mxu0 %v1604
  %1796 = vmatmul.mubr.bf16.gmra.mxu0 %v1603
  %v1797 = vpop.f32.mrf.mxu0
  %v1798 = vadd.f32 %v1302, %v1797
  %v1799 = vpop.f32.mrf.mxu0
  %v1800 = vpop.f32.mrf.mxu0
  %v1801 = vadd.f32 %v1307, %v1800
  %v1802 = vpop.f32.mrf.mxu0
  %1803 = vmatprep.mubr.bf16.mxu0 %v1608
  %1804 = vmatmul.mubr.bf16.gmra.mxu0 %v1607
  %v1805 = vpop.f32.mrf.mxu0
  %v1806 = vadd.f32 %v1312, %v1805
  %v1807 = vpop.f32.mrf.mxu0
  %v1808 = vpop.f32.mrf.mxu0
  %v1809 = vadd.f32 %v1317, %v1808
  %v1810 = vpop.f32.mrf.mxu0
  %1811 = vmatprep.mubr.bf16.mxu0 %v1612
  %1812 = vmatmul.mubr.bf16.gmra.mxu0 %v1611
  %v1813 = vpop.f32.mrf.mxu0
  %v1814 = vadd.f32 %v1322, %v1813
  %v1815 = vpop.f32.mrf.mxu0
  %v1816 = vpop.f32.mrf.mxu0
  %v1817 = vadd.f32 %v1327, %v1816
  %v1818 = vpop.f32.mrf.mxu0
  %1819 = vmatprep.mubr.bf16.mxu0 %v1616
  %1820 = vmatmul.mubr.bf16.gmra.mxu0 %v1615
  %v1821 = vpop.f32.mrf.mxu0
  %v1822 = vadd.f32 %v1332, %v1821
  %v1823 = vpop.f32.mrf.mxu0
  %v1824 = vpop.f32.mrf.mxu0
  %v1825 = vadd.f32 %v1337, %v1824
  %v1826 = vpop.f32.mrf.mxu0
  %1827 = vmatprep.mubr.bf16.mxu0 %v1620
  %1828 = vmatmul.mubr.bf16.gmra.mxu0 %v1619
  %v1829 = vpop.f32.mrf.mxu0
  %v1830 = vadd.f32 %v1342, %v1829
  %v1831 = vpop.f32.mrf.mxu0
  %v1832 = vpop.f32.mrf.mxu0
  %v1833 = vadd.f32 %v1347, %v1832
  %v1834 = vpop.f32.mrf.mxu0
  %1835 = vmatprep.mubr.bf16.mxu0 %v1624
  %1836 = vmatmul.mubr.bf16.gmra.mxu0 %v1623
  %v1837 = vpop.f32.mrf.mxu0
  %v1838 = vadd.f32 %v1352, %v1837
  %v1839 = vpop.f32.mrf.mxu0
  %v1840 = vpop.f32.mrf.mxu0
  %v1841 = vadd.f32 %v1357, %v1840
  %v1842 = vpop.f32.mrf.mxu0
  %1843 = vmatprep.mubr.bf16.mxu0 %v1628
  %1844 = vmatmul.mubr.bf16.gmra.mxu0 %v1627
  %v1845 = vpop.f32.mrf.mxu0
  %v1846 = vadd.f32 %v1362, %v1845
  %v1847 = vpop.f32.mrf.mxu0
  %v1848 = vpop.f32.mrf.mxu0
  %v1849 = vadd.f32 %v1367, %v1848
  %v1850 = vpop.f32.mrf.mxu0
  %1851 = vmatprep.mubr.bf16.mxu0 %v1632
  %1852 = vmatmul.mubr.bf16.gmra.mxu0 %v1631
  %v1853 = vpop.f32.mrf.mxu0
  %v1854 = vadd.f32 %v1372, %v1853
  %v1855 = vpop.f32.mrf.mxu0
  %v1856 = vpop.f32.mrf.mxu0
  %v1857 = vadd.f32 %v1377, %v1856
  %v1858 = vpop.f32.mrf.mxu0
  %1859 = vdwg.mxu0
  %1860 = vmatprep.subr.bf16.mxu0 0
  %1861 = vmatpush1.bf16.msra.mxu0 %v1178
  %1862 = vmatprep.subr.bf16.mxu0 0
  %1863 = vmatpush1.bf16.msra.mxu0 %v1177
  %1864 = vmatprep.subr.bf16.mxu0 0
  %1865 = vmatpush1.bf16.msra.mxu0 %v1176
  %1866 = vmatprep.subr.bf16.mxu0 0
  %1867 = vmatpush1.bf16.msra.mxu0 %v1175
  %1868 = vmatprep.subr.bf16.mxu0 0
  %1869 = vmatpush1.bf16.msra.mxu0 %v1174
  %1870 = vmatprep.subr.bf16.mxu0 0
  %1871 = vmatpush1.bf16.msra.mxu0 %v1173
  %1872 = vmatprep.subr.bf16.mxu0 0
  %1873 = vmatpush1.bf16.msra.mxu0 %v1172
  %1874 = vmatprep.subr.bf16.mxu0 0
  %1875 = vmatpush1.bf16.msra.mxu0 %v1171
  %1876 = vmatprep.subr.bf16.mxu0 0
  %1877 = vmatpush2.bf16.msra.mxu0 %v1186
  %1878 = vmatprep.subr.bf16.mxu0 0
  %1879 = vmatpush2.bf16.msra.mxu0 %v1185
  %1880 = vmatprep.subr.bf16.mxu0 0
  %1881 = vmatpush2.bf16.msra.mxu0 %v1184
  %1882 = vmatprep.subr.bf16.mxu0 0
  %1883 = vmatpush2.bf16.msra.mxu0 %v1183
  %1884 = vmatprep.subr.bf16.mxu0 0
  %1885 = vmatpush2.bf16.msra.mxu0 %v1182
  %1886 = vmatprep.subr.bf16.mxu0 0
  %1887 = vmatpush2.bf16.msra.mxu0 %v1181
  %1888 = vmatprep.subr.bf16.mxu0 0
  %1889 = vmatpush2.bf16.msra.mxu0 %v1180
  %1890 = vmatprep.subr.bf16.mxu0 0
  %1891 = vmatpush2.bf16.msra.mxu0 %v1179
  %1892 = vmatprep.mubr.bf16.mxu0 %v1574
  %1893 = vmatmul.mubr.bf16.gmra.mxu0 %v1573
  %v1894 = vpop.f32.mrf.mxu0
  %v1895 = vadd.f32 %v1734, %v1894
  %v1896 = vpop.f32.mrf.mxu0
  %v1897 = vpop.f32.mrf.mxu0
  %v1898 = vadd.f32 %v1737, %v1897
  %v1899 = vpop.f32.mrf.mxu0
  %1900 = vmatprep.mubr.bf16.mxu0 %v1578
  %1901 = vmatmul.mubr.bf16.gmra.mxu0 %v1577
  %v1902 = vpop.f32.mrf.mxu0
  %v1903 = vadd.f32 %v1742, %v1902
  %v1904 = vpop.f32.mrf.mxu0
  %v1905 = vpop.f32.mrf.mxu0
  %v1906 = vadd.f32 %v1745, %v1905
  %v1907 = vpop.f32.mrf.mxu0
  %1908 = vmatprep.mubr.bf16.mxu0 %v1582
  %1909 = vmatmul.mubr.bf16.gmra.mxu0 %v1581
  %v1910 = vpop.f32.mrf.mxu0
  %v1911 = vadd.f32 %v1750, %v1910
  %v1912 = vpop.f32.mrf.mxu0
  %v1913 = vpop.f32.mrf.mxu0
  %v1914 = vadd.f32 %v1753, %v1913
  %v1915 = vpop.f32.mrf.mxu0
  %1916 = vmatprep.mubr.bf16.mxu0 %v1586
  %1917 = vmatmul.mubr.bf16.gmra.mxu0 %v1585
  %v1918 = vpop.f32.mrf.mxu0
  %v1919 = vadd.f32 %v1758, %v1918
  %v1920 = vpop.f32.mrf.mxu0
  %v1921 = vpop.f32.mrf.mxu0
  %v1922 = vadd.f32 %v1761, %v1921
  %v1923 = vpop.f32.mrf.mxu0
  %1924 = vmatprep.mubr.bf16.mxu0 %v1590
  %1925 = vmatmul.mubr.bf16.gmra.mxu0 %v1589
  %v1926 = vpop.f32.mrf.mxu0
  %v1927 = vadd.f32 %v1766, %v1926
  %v1928 = vpop.f32.mrf.mxu0
  %v1929 = vpop.f32.mrf.mxu0
  %v1930 = vadd.f32 %v1769, %v1929
  %v1931 = vpop.f32.mrf.mxu0
  %1932 = vmatprep.mubr.bf16.mxu0 %v1594
  %1933 = vmatmul.mubr.bf16.gmra.mxu0 %v1593
  %v1934 = vpop.f32.mrf.mxu0
  %v1935 = vadd.f32 %v1774, %v1934
  %v1936 = vpop.f32.mrf.mxu0
  %v1937 = vpop.f32.mrf.mxu0
  %v1938 = vadd.f32 %v1777, %v1937
  %v1939 = vpop.f32.mrf.mxu0
  %1940 = vmatprep.mubr.bf16.mxu0 %v1598
  %1941 = vmatmul.mubr.bf16.gmra.mxu0 %v1597
  %v1942 = vpop.f32.mrf.mxu0
  %v1943 = vadd.f32 %v1782, %v1942
  %v1944 = vpop.f32.mrf.mxu0
  %v1945 = vpop.f32.mrf.mxu0
  %v1946 = vadd.f32 %v1785, %v1945
  %v1947 = vpop.f32.mrf.mxu0
  %1948 = vmatprep.mubr.bf16.mxu0 %v1602
  %1949 = vmatmul.mubr.bf16.gmra.mxu0 %v1601
  %v1950 = vpop.f32.mrf.mxu0
  %v1951 = vadd.f32 %v1790, %v1950
  %v1952 = vpop.f32.mrf.mxu0
  %v1953 = vpop.f32.mrf.mxu0
  %v1954 = vadd.f32 %v1793, %v1953
  %v1955 = vpop.f32.mrf.mxu0
  %1956 = vmatprep.mubr.bf16.mxu0 %v1606
  %1957 = vmatmul.mubr.bf16.gmra.mxu0 %v1605
  %v1958 = vpop.f32.mrf.mxu0
  %v1959 = vadd.f32 %v1798, %v1958
  %v1960 = vpop.f32.mrf.mxu0
  %v1961 = vpop.f32.mrf.mxu0
  %v1962 = vadd.f32 %v1801, %v1961
  %v1963 = vpop.f32.mrf.mxu0
  %1964 = vmatprep.mubr.bf16.mxu0 %v1610
  %1965 = vmatmul.mubr.bf16.gmra.mxu0 %v1609
  %v1966 = vpop.f32.mrf.mxu0
  %v1967 = vadd.f32 %v1806, %v1966
  %v1968 = vpop.f32.mrf.mxu0
  %v1969 = vpop.f32.mrf.mxu0
  %v1970 = vadd.f32 %v1809, %v1969
  %v1971 = vpop.f32.mrf.mxu0
  %1972 = vmatprep.mubr.bf16.mxu0 %v1614
  %1973 = vmatmul.mubr.bf16.gmra.mxu0 %v1613
  %v1974 = vpop.f32.mrf.mxu0
  %v1975 = vadd.f32 %v1814, %v1974
  %v1976 = vpop.f32.mrf.mxu0
  %v1977 = vpop.f32.mrf.mxu0
  %v1978 = vadd.f32 %v1817, %v1977
  %v1979 = vpop.f32.mrf.mxu0
  %1980 = vmatprep.mubr.bf16.mxu0 %v1618
  %1981 = vmatmul.mubr.bf16.gmra.mxu0 %v1617
  %v1982 = vpop.f32.mrf.mxu0
  %v1983 = vadd.f32 %v1822, %v1982
  %v1984 = vpop.f32.mrf.mxu0
  %v1985 = vpop.f32.mrf.mxu0
  %v1986 = vadd.f32 %v1825, %v1985
  %v1987 = vpop.f32.mrf.mxu0
  %1988 = vmatprep.mubr.bf16.mxu0 %v1622
  %1989 = vmatmul.mubr.bf16.gmra.mxu0 %v1621
  %v1990 = vpop.f32.mrf.mxu0
  %v1991 = vadd.f32 %v1830, %v1990
  %v1992 = vpop.f32.mrf.mxu0
  %v1993 = vpop.f32.mrf.mxu0
  %v1994 = vadd.f32 %v1833, %v1993
  %v1995 = vpop.f32.mrf.mxu0
  %1996 = vmatprep.mubr.bf16.mxu0 %v1626
  %1997 = vmatmul.mubr.bf16.gmra.mxu0 %v1625
  %v1998 = vpop.f32.mrf.mxu0
  %v1999 = vadd.f32 %v1838, %v1998
  %v2000 = vpop.f32.mrf.mxu0
  %v2001 = vpop.f32.mrf.mxu0
  %v2002 = vadd.f32 %v1841, %v2001
  %v2003 = vpop.f32.mrf.mxu0
  %2004 = vmatprep.mubr.bf16.mxu0 %v1630
  %2005 = vmatmul.mubr.bf16.gmra.mxu0 %v1629
  %v2006 = vpop.f32.mrf.mxu0
  %v2007 = vadd.f32 %v1846, %v2006
  %v2008 = vpop.f32.mrf.mxu0
  %v2009 = vpop.f32.mrf.mxu0
  %v2010 = vadd.f32 %v1849, %v2009
  %v2011 = vpop.f32.mrf.mxu0
  %2012 = vmatprep.mubr.bf16.mxu0 %v1634
  %2013 = vmatmul.mubr.bf16.gmra.mxu0 %v1633
  %v2014 = vpop.f32.mrf.mxu0
  %v2015 = vadd.f32 %v1854, %v2014
  %v2016 = vpop.f32.mrf.mxu0
  %v2017 = vpop.f32.mrf.mxu0
  %v2018 = vadd.f32 %v1857, %v2017
  %v2019 = vpop.f32.mrf.mxu0
  %2020 = vdwg.mxu0
  %v2021 = vmax.f32 %v1895, 0.0
  %v2022 = vmax.f32 %v1898, 0.0
  %v2023 = vmax.f32 %v1903, 0.0
  %v2024 = vmax.f32 %v1906, 0.0
  %v2025 = vmax.f32 %v1911, 0.0
  %v2026 = vmax.f32 %v1914, 0.0
  %v2027 = vmax.f32 %v1919, 0.0
  %v2028 = vmax.f32 %v1922, 0.0
  %v2029 = vmax.f32 %v1927, 0.0
  %v2030 = vmax.f32 %v1930, 0.0
  %v2031 = vmax.f32 %v1935, 0.0
  %v2032 = vmax.f32 %v1938, 0.0
  %v2033 = vmax.f32 %v1943, 0.0
  %v2034 = vmax.f32 %v1946, 0.0
  %v2035 = vmax.f32 %v1951, 0.0
  %v2036 = vmax.f32 %v1954, 0.0
  %v2037 = vmax.f32 %v1959, 0.0
  %v2038 = vmax.f32 %v1962, 0.0
  %v2039 = vmax.f32 %v1967, 0.0
  %v2040 = vmax.f32 %v1970, 0.0
  %v2041 = vmax.f32 %v1975, 0.0
  %v2042 = vmax.f32 %v1978, 0.0
  %v2043 = vmax.f32 %v1983, 0.0
  %v2044 = vmax.f32 %v1986, 0.0
  %v2045 = vmax.f32 %v1991, 0.0
  %v2046 = vmax.f32 %v1994, 0.0
  %v2047 = vmax.f32 %v1999, 0.0
  %v2048 = vmax.f32 %v2002, 0.0
  %v2049 = vmax.f32 %v2007, 0.0
  %v2050 = vmax.f32 %v2010, 0.0
  %v2051 = vmax.f32 %v2015, 0.0
  %v2052 = vmax.f32 %v2018, 0.0
  %v2053 = vld [vmem:[%s5] sm:$0xff]
  %v2054 = vpack.c.bf16 %v2022, %v2021
  %v2055 = vpack.c.bf16 %v2024, %v2023
  %v2056 = vpack.c.bf16 %v2026, %v2025
  %v2057 = vpack.c.bf16 %v2028, %v2027
  %v2058 = vpack.c.bf16 %v2030, %v2029
  %v2059 = vpack.c.bf16 %v2032, %v2031
  %v2060 = vpack.c.bf16 %v2034, %v2033
  %v2061 = vpack.c.bf16 %v2036, %v2035
  %v2062 = vpack.c.bf16 %v2038, %v2037
  %v2063 = vpack.c.bf16 %v2040, %v2039
  %v2064 = vpack.c.bf16 %v2042, %v2041
  %v2065 = vpack.c.bf16 %v2044, %v2043
  %v2066 = vpack.c.bf16 %v2046, %v2045
  %v2067 = vpack.c.bf16 %v2048, %v2047
  %v2068 = vpack.c.bf16 %v2050, %v2049
  %v2069 = vpack.c.bf16 %v2052, %v2051
  %v2070 = vld [vmem:[%s6] sm:$0xff]
  %2072 = vset.pattern.permute.xlu0 0
  %2073 = vperm.xlu0 %2072, %v2070
  %v2074 = vpop.permute.xlu0 %2073
  %v2077 = vunpack.c.l.b16 %v2053
  %v2078 = vunpack.c.h.b16 %v2053
  %v2079 = vpack.c.b16 %v2077, %v2077
  %v2080 = vpack.c.b16 %v2078, %v2078
  %2083 = vmatprep.subr.bf16.mxu0 0
  %2084 = vmatpush1.bf16.msra.mxu0 %v2061
  %2085 = vmatprep.subr.bf16.mxu0 0
  %2086 = vmatpush1.bf16.msra.mxu0 %v2060
  %2087 = vmatprep.subr.bf16.mxu0 0
  %2088 = vmatpush1.bf16.msra.mxu0 %v2059
  %2089 = vmatprep.subr.bf16.mxu0 0
  %2090 = vmatpush1.bf16.msra.mxu0 %v2058
  %2091 = vmatprep.subr.bf16.mxu0 0
  %2092 = vmatpush1.bf16.msra.mxu0 %v2057
  %2093 = vmatprep.subr.bf16.mxu0 0
  %2094 = vmatpush1.bf16.msra.mxu0 %v2056
  %2095 = vmatprep.subr.bf16.mxu0 0
  %2096 = vmatpush1.bf16.msra.mxu0 %v2055
  %2097 = vmatprep.subr.bf16.mxu0 0
  %2098 = vmatpush1.bf16.msra.mxu0 %v2054
  %2099 = vmatprep.subr.bf16.mxu0 0
  %2100 = vmatpush2.bf16.msra.mxu0 %v2069
  %2101 = vmatprep.subr.bf16.mxu0 0
  %2102 = vmatpush2.bf16.msra.mxu0 %v2068
  %2103 = vmatprep.subr.bf16.mxu0 0
  %2104 = vmatpush2.bf16.msra.mxu0 %v2067
  %2105 = vmatprep.subr.bf16.mxu0 0
  %2106 = vmatpush2.bf16.msra.mxu0 %v2066
  %2107 = vmatprep.subr.bf16.mxu0 0
  %2108 = vmatpush2.bf16.msra.mxu0 %v2065
  %2109 = vmatprep.subr.bf16.mxu0 0
  %2110 = vmatpush2.bf16.msra.mxu0 %v2064
  %2111 = vmatprep.subr.bf16.mxu0 0
  %2112 = vmatpush2.bf16.msra.mxu0 %v2063
  %2113 = vmatprep.subr.bf16.mxu0 0
  %2114 = vmatpush2.bf16.msra.mxu0 %v2062
  %2115 = vmatprep.mubr.bf16.mxu0 %v2080
  %2116 = vmatmul.mubr.bf16.gmra.mxu0 %v2079
  %v2117 = vpop.f32.mrf.mxu0
  %v2118 = vadd.f32 %v2074, %v2117
  %v2119 = vpop.f32.mrf.mxu0
  %v2120 = vpop.f32.mrf.mxu0
  %v2121 = vpop.f32.mrf.mxu0
  %2122 = vdwg.mxu0
  %2123 = vst [vmem:[%s7] sm:$0xff] %v2118
  // Predicated region
  $region30: #{qnetwork_forward.1} parent=0 // pred_check
    _
  $region31: #{qnetwork_forward.1} parent=0 // pred_check_branch
    %2125 = sbr.rel (0) target = $region33
  $region32: #{qnetwork_forward.1} parent=0 // pred_region
    _
  $region33: #{qnetwork_forward.1} parent=0 // pred_fallthru
    _
  // Predicated region
  $region34: #{qnetwork_forward.1} parent=0 // pred_check
    _
  $region35: #{qnetwork_forward.1} parent=0 // pred_check_branch
    %2127 = sbr.rel (0) target = $region37
  $region36: #{qnetwork_forward.1} parent=0 // pred_region
    _
  $region37: #{qnetwork_forward.1} parent=0 // pred_fallthru
    _

</llo_original>
